<compile_context>
chip_gen: v6e
topology: v6e:2x2x1
jax: 0.10.0
libtpu: 0.0.40
codegen_flags: <defaults>
</compile_context>

<pallas_src>
import functools
import math

import jax
import jax.numpy as jnp
import numpy as np
from jax import lax
from jax.experimental import pallas as pl
from jax.experimental.pallas import tpu as pltpu


def _pos_embed_kernel(scale_ref, phase_ref, o_ref, *, W, tile_hw):
    """One (C_out, tile_hw) lane tile of the flattened (C_out, H*W) embedding.

    scale_ref : (C_out, 1)  per-channel multiplier = inv_dim_t * norm_factor
                            (rows [0, F): y-half,  rows [F, 2F): x-half)
    phase_ref : (C_out, 1)  per-channel phase: 0 for even channels, pi/2 for odd
                            (sin(x + pi/2) == cos(x), single transcendental).
    o_ref     : (C_out, tile_hw)  out[c, p] = sin(embed(p) * scale[c] + phase[c])
                where p = h * W + w is the flattened spatial index, and embed is
                the y cumsum (h+1) for the first half, x cumsum (w+1) otherwise.
    """
    C_out = o_ref.shape[0]
    F = C_out // 2
    Wf = jnp.float32(W)

    t = pl.program_id(0)
    base = t * tile_hw
    # Flattened spatial index for this lane tile (exact in f32 for H*W < 2^24).
    p = (lax.broadcasted_iota(jnp.int32, (1, tile_hw), 1) + base).astype(jnp.float32)
    row = jnp.floor(p / Wf)
    col = p - row * Wf
    # Guard against a 1-ulp-low quotient at exact multiples of W.
    fix = (col >= Wf).astype(jnp.float32)
    row = row + fix
    col = col - fix * Wf
    y_pos = row + 1.0  # cumsum of ones along H  -> (1, tile_hw)
    x_pos = col + 1.0  # cumsum of ones along W  -> (1, tile_hw)

    sc = scale_ref[...]  # (C_out, 1)
    ph = phase_ref[...]  # (C_out, 1)

    # pos_y channels then pos_x channels (matches cat((pos_y, pos_x), dim=3)).
    o_ref[0:F, :] = jnp.sin(y_pos * sc[0:F, :] + ph[0:F, :])
    o_ref[F:C_out, :] = jnp.sin(x_pos * sc[F:C_out, :] + ph[F:C_out, :])


def position_embedding_sine(x, *, num_pos_feats=64, temperature=10000,
                            normalize=False, scale=None):
    """Pallas implementation of PositionEmbeddingSine.forward.

    x : (B, C_in, H, W)  -- only the shape is used (exactly like the reference).
    returns pos : (B, 2*(num_pos_feats//2), H, W) float32.
    """
    if scale is not None and normalize is False:
        raise ValueError('normalize should be True if scale is passed')
    if scale is None:
        scale = 2 * math.pi

    F = num_pos_feats // 2
    C_out = 2 * F
    B, _, H, W = x.shape
    HW = H * W

    # ---- compile-time per-channel constants (numpy, trace time) --------------
    i = np.arange(F, dtype=np.float32)
    # Literal reference math: temperature ** floor((2 * (i / 2)) / F)
    # (inner torch.div is true division in the reference).
    exponent = np.floor((2.0 * (i / 2.0)) / np.float32(F))
    inv_dim_t = (1.0 / (np.float32(temperature) ** exponent)).astype(np.float32)
    if normalize:
        # cumsum of ones -> last row/col value is exactly H / W.
        y_norm = np.float32(scale) / (np.float32(H) + np.float32(1e-6))
        x_norm = np.float32(scale) / (np.float32(W) + np.float32(1e-6))
    else:
        y_norm = np.float32(1.0)
        x_norm = np.float32(1.0)
    chan_scale = np.concatenate([inv_dim_t * y_norm, inv_dim_t * x_norm])
    chan_scale = chan_scale.reshape(C_out, 1).astype(np.float32)
    phase_half = np.where(np.arange(F) % 2 == 0, 0.0, np.pi / 2.0)
    chan_phase = np.concatenate([phase_half, phase_half])
    chan_phase = chan_phase.reshape(C_out, 1).astype(np.float32)

    # ---- lane tiling over the flattened H*W axis ------------------------------
    # ~2 MiB output block; tile_hw is a multiple of 128 (or the full extent), so
    # stores are unmasked.  Partial last tiles (HW not a multiple of tile_hw) are
    # handled by Pallas' boundary-block write masking.
    target_block_bytes = 2 * 1024 * 1024
    max_lanes = max(128, (target_block_bytes // (C_out * 4)) // 128 * 128)
    tile_hw = HW if HW <= max_lanes else max_lanes
    num_tiles = pl.cdiv(HW, tile_hw)

    kernel = functools.partial(_pos_embed_kernel, W=W, tile_hw=tile_hw)

    pos_flat = pl.pallas_call(
        kernel,
        out_shape=jax.ShapeDtypeStruct((C_out, HW), jnp.float32),
        grid=(num_tiles,),
        in_specs=[
            pl.BlockSpec((C_out, 1), lambda t: (0, 0)),
            pl.BlockSpec((C_out, 1), lambda t: (0, 0)),
        ],
        out_specs=pl.BlockSpec((C_out, tile_hw), lambda t: (0, t)),
        compiler_params=pltpu.CompilerParams(
            dimension_semantics=("parallel",)),
    )(jnp.asarray(chan_scale), jnp.asarray(chan_phase))

    pos = pos_flat.reshape(C_out, H, W)
    # Batch dimension is a pure broadcast (embedding does not depend on x values).
    return jnp.broadcast_to(pos[None], (B, C_out, H, W))


def _reference_position_embedding_sine(x, num_pos_feats=64, temperature=10000,
                                       normalize=False, scale=None):
    """Pure-JAX transliteration of the PyTorch forward (for verification)."""
    if scale is None:
        scale = 2 * math.pi
    F = num_pos_feats // 2
    B, _, H, W = x.shape
    not_mask = jnp.ones((B, H, W), jnp.float32)
    y_embed = jnp.cumsum(not_mask, axis=1)
    x_embed = jnp.cumsum(not_mask, axis=2)
    if normalize:
        eps = 1e-6
        y_embed = y_embed / (y_embed[:, -1:, :] + eps) * scale
        x_embed = x_embed / (x_embed[:, :, -1:] + eps) * scale
    dim_t = jnp.arange(F, dtype=jnp.float32)
    dim_t = jnp.float32(temperature) ** jnp.floor((2.0 * (dim_t / 2.0)) / F)
    pos_x = x_embed[:, :, :, None] / dim_t
    pos_y = y_embed[:, :, :, None] / dim_t
    pos_x = jnp.stack(
        (jnp.sin(pos_x[..., 0::2]), jnp.cos(pos_x[..., 1::2])), axis=4
    ).reshape(B, H, W, F)
    pos_y = jnp.stack(
        (jnp.sin(pos_y[..., 0::2]), jnp.cos(pos_y[..., 1::2])), axis=4
    ).reshape(B, H, W, F)
    pos = jnp.concatenate((pos_y, pos_x), axis=3)
    return jnp.transpose(pos, (0, 3, 1, 2))


if __name__ == "__main__":
    key = jax.random.PRNGKey(0)

    # Default module config (num_pos_feats=64 -> 64 output channels).
    B, C_in, H, W = 2, 4, 16, 16
    x = jax.random.normal(key, (B, C_in, H, W), dtype=jnp.float32)

    pos = position_embedding_sine(x, num_pos_feats=64, temperature=10000,
                                  normalize=False)
    pos = jax.block_until_ready(pos)
    ref = _reference_position_embedding_sine(x, num_pos_feats=64,
                                             temperature=10000, normalize=False)
    assert pos.shape == (B, 64, H, W), pos.shape
    assert pos.dtype == jnp.float32
    assert jnp.allclose(pos, ref, atol=1e-4, rtol=1e-5), (
        float(jnp.max(jnp.abs(pos - ref))))

    # Non-square spatial map with non-power-of-two W + normalize=True path.
    B2, C2, H2, W2 = 1, 3, 8, 24
    x2 = jax.random.normal(key, (B2, C2, H2, W2), dtype=jnp.float32)
    pos2 = position_embedding_sine(x2, num_pos_feats=64, temperature=10000,
                                   normalize=True)
    pos2 = jax.block_until_ready(pos2)
    ref2 = _reference_position_embedding_sine(x2, num_pos_feats=64,
                                              temperature=10000, normalize=True)
    assert pos2.shape == (B2, 64, H2, W2), pos2.shape
    assert jnp.allclose(pos2, ref2, atol=1e-4, rtol=1e-5), (
        float(jnp.max(jnp.abs(pos2 - ref2))))

    print("KERNEL_OK")
</pallas_src>

<mosaic_0001>
module attributes {stable_mosaic.version = 11 : i64} {
  func.func @_pos_embed_kernel(%arg0: i32, %arg1: memref<64x1xf32, #tpu.memory_space<vmem>>, %arg2: memref<64x1xf32, #tpu.memory_space<vmem>>, %arg3: memref<64x256xf32, #tpu.memory_space<vmem>>) attributes {dimension_semantics = [#tpu.dimension_semantics<parallel>], iteration_bounds = array<i64: 1>, scalar_prefetch = 0 : i64, scratch_operands = 0 : i64, tpu.core_type = #tpu.core_type<tc>, window_params = [{pipeline_mode = #tpu.pipeline_mode<synchronous>, transform_indices = @transform_0, window_bounds = array<i64: 64, 1>}, {pipeline_mode = #tpu.pipeline_mode<synchronous>, transform_indices = @transform_1, window_bounds = array<i64: 64, 1>}, {transform_indices = @transform_2, window_bounds = array<i64: 64, 256>}]} {
    %c256_i32 = arith.constant 256 : i32
    %0 = arith.muli %arg0, %c256_i32 : i32
    %1 = tpu.iota {dimensions = array<i32: 1>} : vector<1x256xi32>
    %2 = vector.broadcast %0 : i32 to vector<1x256xi32>
    %3 = arith.addi %1, %2 : vector<1x256xi32>
    %4 = arith.sitofp %3 : vector<1x256xi32> to vector<1x256xf32>
    %cst = arith.constant 1.600000e+01 : f32
    %5 = vector.broadcast %cst : f32 to vector<1x256xf32>
    %6 = arith.divf %4, %5 : vector<1x256xf32>
    %7 = math.floor %6 : vector<1x256xf32>
    %cst_0 = arith.constant 1.600000e+01 : f32
    %8 = vector.broadcast %cst_0 : f32 to vector<1x256xf32>
    %9 = arith.mulf %7, %8 : vector<1x256xf32>
    %10 = arith.subf %4, %9 : vector<1x256xf32>
    %cst_1 = arith.constant 1.600000e+01 : f32
    %11 = vector.broadcast %cst_1 : f32 to vector<1x256xf32>
    %12 = arith.cmpf oge, %10, %11 : vector<1x256xf32>
    %13 = arith.extui %12 : vector<1x256xi1> to vector<1x256xi32>
    %14 = arith.sitofp %13 : vector<1x256xi32> to vector<1x256xf32>
    %15 = arith.addf %7, %14 : vector<1x256xf32>
    %cst_2 = arith.constant 1.600000e+01 : f32
    %16 = vector.broadcast %cst_2 : f32 to vector<1x256xf32>
    %17 = arith.mulf %14, %16 : vector<1x256xf32>
    %18 = arith.subf %10, %17 : vector<1x256xf32>
    %cst_3 = arith.constant 1.000000e+00 : f32
    %19 = vector.broadcast %cst_3 : f32 to vector<1x256xf32>
    %20 = arith.addf %15, %19 : vector<1x256xf32>
    %cst_4 = arith.constant 1.000000e+00 : f32
    %21 = vector.broadcast %cst_4 : f32 to vector<1x256xf32>
    %22 = arith.addf %18, %21 : vector<1x256xf32>
    %c0 = arith.constant 0 : index
    %c0_5 = arith.constant 0 : index
    %23 = vector.load %arg1[%c0, %c0_5] : memref<64x1xf32, #tpu.memory_space<vmem>>, vector<64x1xf32>
    %c0_6 = arith.constant 0 : index
    %c0_7 = arith.constant 0 : index
    %24 = vector.load %arg2[%c0_6, %c0_7] : memref<64x1xf32, #tpu.memory_space<vmem>>, vector<64x1xf32>
    %25 = vector.extract_strided_slice %23 {offsets = [0, 0], sizes = [32, 1], strides = [1, 1]} : vector<64x1xf32> to vector<32x1xf32>
    %26 = vector.broadcast %20 : vector<1x256xf32> to vector<32x256xf32>
    %27 = vector.broadcast %25 : vector<32x1xf32> to vector<32x256xf32>
    %28 = arith.mulf %26, %27 : vector<32x256xf32>
    %29 = vector.extract_strided_slice %24 {offsets = [0, 0], sizes = [32, 1], strides = [1, 1]} : vector<64x1xf32> to vector<32x1xf32>
    %30 = vector.broadcast %29 : vector<32x1xf32> to vector<32x256xf32>
    %31 = arith.addf %28, %30 : vector<32x256xf32>
    %32 = math.sin %31 : vector<32x256xf32>
    %c0_8 = arith.constant 0 : index
    %c0_9 = arith.constant 0 : index
    %33 = vector.load %arg3[%c0_8, %c0_9] : memref<64x256xf32, #tpu.memory_space<vmem>>, vector<32x256xf32>
    tpu.vector_store %arg3[%c0_8, %c0_9], %32 {strides = array<i32>} : memref<64x256xf32, #tpu.memory_space<vmem>>, vector<32x256xf32>,
    %34 = vector.extract_strided_slice %23 {offsets = [32, 0], sizes = [32, 1], strides = [1, 1]} : vector<64x1xf32> to vector<32x1xf32>
    %35 = vector.broadcast %22 : vector<1x256xf32> to vector<32x256xf32>
    %36 = vector.broadcast %34 : vector<32x1xf32> to vector<32x256xf32>
    %37 = arith.mulf %35, %36 : vector<32x256xf32>
    %38 = vector.extract_strided_slice %24 {offsets = [32, 0], sizes = [32, 1], strides = [1, 1]} : vector<64x1xf32> to vector<32x1xf32>
    %39 = vector.broadcast %38 : vector<32x1xf32> to vector<32x256xf32>
    %40 = arith.addf %37, %39 : vector<32x256xf32>
    %41 = math.sin %40 : vector<32x256xf32>
    %c32 = arith.constant 32 : index
    %c0_10 = arith.constant 0 : index
    %42 = vector.load %arg3[%c32, %c0_10] : memref<64x256xf32, #tpu.memory_space<vmem>>, vector<32x256xf32>
    tpu.vector_store %arg3[%c32, %c0_10], %41 {strides = array<i32>} : memref<64x256xf32, #tpu.memory_space<vmem>>, vector<32x256xf32>,
    return
  }
  func.func @transform_0(%arg0: i32) -> (i32, i32) {
    %c0_i32 = arith.constant 0 : i32
    %c0_i32_0 = arith.constant 0 : i32
    %c0_i32_1 = arith.constant 0 : i32
    return %c0_i32, %c0_i32_0 : i32, i32
  }
  func.func @transform_1(%arg0: i32) -> (i32, i32) {
    %c0_i32 = arith.constant 0 : i32
    %c0_i32_0 = arith.constant 0 : i32
    %c0_i32_1 = arith.constant 0 : i32
    return %c0_i32, %c0_i32_0 : i32, i32
  }
  func.func @transform_2(%arg0: i32) -> (i32, i32) {
    %c0_i32 = arith.constant 0 : i32
    %c0_i32_0 = arith.constant 0 : i32
    return %c0_i32, %arg0 : i32, i32
  }
}

</mosaic_0001>

<llo_original>
// kernel: tpu_custom_call.1
$region0: #{tpu_custom_call.1}
  #allocation0 [shape = 'u32[]', space=smem, size = 0x4, offset = 0x4, fixed_abs, tag = 'smem constant byte address 0x4 - core index']
  #allocation1 [shape = 'u32[144,128]{1,0:T(1,128)}', space=vmem, size = 0x12000, scoped, tag = 'internal scratch']
  %s0 = inlined_call_operand.vmem [shape: f32[64,1], index: 0, kind: input, shape index: {}]
  %s1 = inlined_call_operand.vmem [shape: f32[64,1], index: 1, kind: input, shape index: {}]
  %s2 = inlined_call_operand.hbm [shape: f32[64,256], index: 2, kind: output, shape index: {}]
  %s3 = sld [smem:[#allocation0]]
  $region18: #{tpu_custom_call.1} parent=0
    _
  %s5 = ssub.s32 1, %s3
  %s6 = scalar_select 0, %s5, %s3
  $region1: #{tpu_custom_call.1} parent=0
    #allocation2 [shape = 'u8[65536]{0}', space=vmem, size = 0x10000, scoped, tag = 'output window, operand 0, single buffered']
    #allocation3 [shape = 's32[1]{0}', space=sflag, size = 0x4, scoped, tag = 'scoped memory for tpu_custom_call.1']
    %7 = vsyncpa [#allocation3], 0
    // Predicated region
    $region2: #{tpu_custom_call.1} parent=1 // pred_check
      _
    $region3: #{tpu_custom_call.1} parent=1 // pred_check_branch
      %9 = sbr.rel (0) target = $region5
    $region4: #{tpu_custom_call.1} parent=1 // pred_region
      _
    $region5: #{tpu_custom_call.1} parent=1 // pred_fallthru
      _
    // Predicated region
    $region6: #{tpu_custom_call.1} parent=1 // pred_check
      _
    $region7: #{tpu_custom_call.1} parent=1 // pred_check_branch
      %11 = sbr.rel (0) target = $region9
    $region8: #{tpu_custom_call.1} parent=1 // pred_region
      _
    $region9: #{tpu_custom_call.1} parent=1 // pred_fallthru
      _
    %s12 = smul.u32 0, 256
    %v13 = vlaneseq
    %v14 = vand.u32 %v13, 127
    %v15 = vadd.s32 %v14, 128
    %v16 = vstv %s12
    %v17 = vadd.s32 %v14, %v16
    %v18 = vadd.s32 %v15, %v16
    %v19 = vcvt.s32.f32 %v17
    %v20 = vcvt.s32.f32 %v18
    %v21 = vrcp.pop 16.0
    %v22 = vmul.f32 %v19, %v21
    %v23 = vmul.f32 %v20, %v21
    %v24 = vfloor.f32 %v22
    %v25 = vfloor.f32 %v23
    %v26 = vmul.f32 %v24, 16.0
    %v27 = vmul.f32 %v25, 16.0
    %v28 = vsub.f32 %v19, %v26
    %v29 = vsub.f32 %v20, %v27
    %vm30 = vcmp.ge.f32.partialorder %v28, 16.0
    %vm31 = vcmp.ge.f32.partialorder %v29, 16.0
    %v32 = vsel %vm30, 1, 0
    %v33 = vsel %vm31, 1, 0
    %v34 = vcvt.s32.f32 %v32
    %v35 = vcvt.s32.f32 %v33
    %v36 = vadd.f32 %v24, %v34
    %v37 = vadd.f32 %v25, %v35
    %v38 = vmul.f32 %v34, 16.0
    %v39 = vmul.f32 %v35, 16.0
    %v40 = vsub.f32 %v28, %v38
    %v41 = vsub.f32 %v29, %v39
    %v42 = vadd.f32 %v36, 1.0
    %v43 = vadd.f32 %v37, 1.0
    %v44 = vadd.f32 %v40, 1.0
    %v45 = vadd.f32 %v41, 1.0
    %v46 = vld [vmem:[%s0] sm:$0xff]
    %v47 = vld [vmem:[%s0 + $0x8] sm:$0xff]
    %v48 = vld [vmem:[%s0 + $0x10] sm:$0xff]
    %v49 = vld [vmem:[%s0 + $0x18] sm:$0xff]
    %v50 = vld [vmem:[%s0 + $0x20] sm:$0xff]
    %v51 = vld [vmem:[%s0 + $0x28] sm:$0xff]
    %v52 = vld [vmem:[%s0 + $0x30] sm:$0xff]
    %v53 = vld [vmem:[%s0 + $0x38] sm:$0xff]
    %v54 = vld [vmem:[%s1] sm:$0xff]
    %v55 = vld [vmem:[%s1 + $0x8] sm:$0xff]
    %v56 = vld [vmem:[%s1 + $0x10] sm:$0xff]
    %v57 = vld [vmem:[%s1 + $0x18] sm:$0xff]
    %v58 = vld [vmem:[%s1 + $0x20] sm:$0xff]
    %v59 = vld [vmem:[%s1 + $0x28] sm:$0xff]
    %v60 = vld [vmem:[%s1 + $0x30] sm:$0xff]
    %v61 = vld [vmem:[%s1 + $0x38] sm:$0xff]
    %63 = vset.pattern.permute.xlu0 0
    %64 = vperm.xlu0 %63, %v46
    %v65 = vpop.permute.xlu0 %64
    %68 = vset.pattern.permute.xlu0 0
    %69 = vperm.xlu0 %68, %v47
    %v70 = vpop.permute.xlu0 %69
    %73 = vset.pattern.permute.xlu0 0
    %74 = vperm.xlu0 %73, %v48
    %v75 = vpop.permute.xlu0 %74
    %78 = vset.pattern.permute.xlu0 0
    %79 = vperm.xlu0 %78, %v49
    %v80 = vpop.permute.xlu0 %79
    %v82 = vmul.f32 %v42, %v65
    %v83 = vmul.f32 %v43, %v65
    %v84 = vmul.f32 %v42, %v70
    %v85 = vmul.f32 %v43, %v70
    %v86 = vmul.f32 %v42, %v75
    %v87 = vmul.f32 %v43, %v75
    %v88 = vmul.f32 %v42, %v80
    %v89 = vmul.f32 %v43, %v80
    %91 = vset.pattern.permute.xlu0 0
    %92 = vperm.xlu0 %91, %v54
    %v93 = vpop.permute.xlu0 %92
    %96 = vset.pattern.permute.xlu0 0
    %97 = vperm.xlu0 %96, %v55
    %v98 = vpop.permute.xlu0 %97
    %101 = vset.pattern.permute.xlu0 0
    %102 = vperm.xlu0 %101, %v56
    %v103 = vpop.permute.xlu0 %102
    %106 = vset.pattern.permute.xlu0 0
    %107 = vperm.xlu0 %106, %v57
    %v108 = vpop.permute.xlu0 %107
    %v110 = vadd.f32 %v82, %v93
    %v111 = vadd.f32 %v83, %v93
    %v112 = vadd.f32 %v84, %v98
    %v113 = vadd.f32 %v85, %v98
    %v114 = vadd.f32 %v86, %v103
    %v115 = vadd.f32 %v87, %v103
    %v116 = vadd.f32 %v88, %v108
    %v117 = vadd.f32 %v89, %v108
    %v118 = vand.u32 2147483647, %v110
    %vm119 = vcmp.le.f32.partialorder %v118, 0.7853982
    %vm120 = vcmp.lt.s32.totalorder %v110, 0
    %v121 = vand.u32 %v110, 2139095040
    %v122 = vshrl.u32 %v121, 23
    %v123 = vsub.s32 %v122, 127
    %v124 = vand.u32 2147483647, %v110
    %v125 = vand.u32 %v124, 8388607
    %v126 = vor.u32 %v125, 8388608
    %v127 = vsub.s32 0, %v126
    %v128 = vadd.s32 %v123, 1
    %vm129 = vcmp.gt.s32.totalorder %v128, 0
    %v130 = vsel %vm129, %v128, 0
    %v131 = vshrl.u32 %v130, 5
    %v132 = vand.u32 %v130, 31
    %v133 = vsub.s32 32, %v132
    %v134 = vshrl.u32 683565275, %v133
    %v135 = vshll.u32 683565275, %v132
    %v136 = vshrl.u32 2475754826, %v133
    %v137 = vor.u32 %v135, %v136
    %v138 = vshll.u32 2475754826, %v132
    %v139 = vshrl.u32 2131351028, %v133
    %v140 = vor.u32 %v138, %v139
    %v141 = vshll.u32 2131351028, %v132
    %v142 = vshrl.u32 2102212464, %v133
    %v143 = vor.u32 %v141, %v142
    %v144 = vshll.u32 2102212464, %v132
    %v145 = vshrl.u32 920167782, %v133
    %v146 = vor.u32 %v144, %v145
    %v147 = vshll.u32 920167782, %v132
    %v148 = vshrl.u32 1326507024, %v133
    %v149 = vor.u32 %v147, %v148
    %vm150 = vcmp.lt.s32.totalorder %v131, 1
    %vm151 = vcmp.lt.s32.totalorder %v131, 2
    %vm152 = vcmp.lt.s32.totalorder %v131, 3
    %vm153 = vcmp.lt.s32.totalorder %v131, 4
    %v154 = vsel %vm150, %v134, %v137
    %v155 = vsel %vm153, %v143, 2102212464
    %v156 = vsel %vm152, %v140, %v155
    %v157 = vsel %vm151, %v154, %v156
    %v158 = vsel %vm150, %v137, %v140
    %v159 = vsel %vm153, %v146, 920167782
    %v160 = vsel %vm152, %v143, %v159
    %v161 = vsel %vm151, %v158, %v160
    %v162 = vsel %vm150, %v140, %v143
    %v163 = vsel %vm153, %v149, 1326507024
    %v164 = vsel %vm152, %v146, %v163
    %v165 = vsel %vm151, %v162, %v164
    %v166 = vshll.u32 %v126, 8
    %v167 = vmul.u32.u64.compose %v166, %v165
    %v168 = vextract.low.u32 %v167
    %v169 = vextract.high.u32 %v167
    %v170 = vmul.u32.u64.compose %v166, %v161
    %v171 = vextract.low.u32 %v170
    %v172 = vextract.high.u32 %v170
    %v173 = vmul.u32 %v166, %v157
    %v174 = vadd.s32 %v169, %v171
    %vm175 = vc.u32 %v169, %v171
    %v176 = vadd.s32 %v172, 1
    %v177 = vsel %vm175, %v176, %v172
    %v178 = vadd.s32 %v173, %v177
    %v179 = vadd.s32 %v178, 536870912
    %v180 = vshrl.u32 %v179, 30
    %v181 = vshll.u32 %v180, 30
    %v182 = vsub.s32 %v178, %v181
    %vm183 = vcmp.lt.s32.totalorder %v182, 0
    %v184 = vsub.s32 0, %v182
    %v185 = vsel %vm183, %v184, %v182
    %v186 = vclz %v185
    %v187 = vsub.s32 %v186, 2
    %vm188 = vcmp.gt.s32.totalorder 0, %v187
    %v189 = vsel %vm188, 0, %v187
    %v190 = vsub.s32 32, %v189
    %v191 = vshll.u32 %v182, %v189
    %v192 = vshrl.u32 %v174, %v190
    %v193 = vor.u32 %v191, %v192
    %v194 = vsub.s32 4294967266, %v189
    %v195 = vadd.s32 %v194, 127
    %v196 = vshll.u32 %v195, 23
    %v197 = vor.u32 4788187, %v196
    %v198 = vand.u32 2147483647, %v197
    %v200 = vcvt.s32.f32 %v193
    %v201 = vmul.f32 %v200, %v198
    %v202 = vxor.u32 %v201, 2147483648
    %v203 = vsel %vm120, %v202, %v201
    %v204 = vsub.s32 4, %v180
    %v205 = vsel %vm120, %v204, %v180
    %v206 = vsel %vm119, %v110, %v203
    %v207 = vsel %vm119, 0, %v205
    %v208 = vcosq.f32.pop %v206
    %v209 = vsinq.f32.pop %v206
    %vm210 = vweird.f32 %v110
    %v211 = vadd.s32 %v207, 3
    %v212 = vand.u32 %v211, 3
    %vm213 = vcmp.lt.s32.totalorder %v212, 2
    %vm214 = vcmp.eq.s32.totalorder %v212, 0
    %v215 = vxor.u32 %v209, 2147483648
    %v216 = vsel %vm214, %v208, %v215
    %vm217 = vcmp.eq.s32.totalorder %v212, 2
    %v218 = vxor.u32 %v208, 2147483648
    %v219 = vsel %vm217, %v218, %v209
    %v220 = vsel %vm213, %v216, %v219
    %v221 = vsel %vm210, nan, %v220
    %v222 = vand.u32 2147483647, %v111
    %vm223 = vcmp.le.f32.partialorder %v222, 0.7853982
    %vm224 = vcmp.lt.s32.totalorder %v111, 0
    %v225 = vand.u32 %v111, 2139095040
    %v226 = vshrl.u32 %v225, 23
    %v227 = vsub.s32 %v226, 127
    %v228 = vand.u32 2147483647, %v111
    %v229 = vand.u32 %v228, 8388607
    %v230 = vor.u32 %v229, 8388608
    %v231 = vsub.s32 0, %v230
    %v232 = vadd.s32 %v227, 1
    %vm233 = vcmp.gt.s32.totalorder %v232, 0
    %v234 = vsel %vm233, %v232, 0
    %v235 = vshrl.u32 %v234, 5
    %v236 = vand.u32 %v234, 31
    %v237 = vsub.s32 32, %v236
    %v238 = vshrl.u32 683565275, %v237
    %v239 = vshll.u32 683565275, %v236
    %v240 = vshrl.u32 2475754826, %v237
    %v241 = vor.u32 %v239, %v240
    %v242 = vshll.u32 2475754826, %v236
    %v243 = vshrl.u32 2131351028, %v237
    %v244 = vor.u32 %v242, %v243
    %v245 = vshll.u32 2131351028, %v236
    %v246 = vshrl.u32 2102212464, %v237
    %v247 = vor.u32 %v245, %v246
    %v248 = vshll.u32 2102212464, %v236
    %v249 = vshrl.u32 920167782, %v237
    %v250 = vor.u32 %v248, %v249
    %v251 = vshll.u32 920167782, %v236
    %v252 = vshrl.u32 1326507024, %v237
    %v253 = vor.u32 %v251, %v252
    %vm254 = vcmp.lt.s32.totalorder %v235, 1
    %vm255 = vcmp.lt.s32.totalorder %v235, 2
    %vm256 = vcmp.lt.s32.totalorder %v235, 3
    %vm257 = vcmp.lt.s32.totalorder %v235, 4
    %v258 = vsel %vm254, %v238, %v241
    %v259 = vsel %vm257, %v247, 2102212464
    %v260 = vsel %vm256, %v244, %v259
    %v261 = vsel %vm255, %v258, %v260
    %v262 = vsel %vm254, %v241, %v244
    %v263 = vsel %vm257, %v250, 920167782
    %v264 = vsel %vm256, %v247, %v263
    %v265 = vsel %vm255, %v262, %v264
    %v266 = vsel %vm254, %v244, %v247
    %v267 = vsel %vm257, %v253, 1326507024
    %v268 = vsel %vm256, %v250, %v267
    %v269 = vsel %vm255, %v266, %v268
    %v270 = vshll.u32 %v230, 8
    %v271 = vmul.u32.u64.compose %v270, %v269
    %v272 = vextract.low.u32 %v271
    %v273 = vextract.high.u32 %v271
    %v274 = vmul.u32.u64.compose %v270, %v265
    %v275 = vextract.low.u32 %v274
    %v276 = vextract.high.u32 %v274
    %v277 = vmul.u32 %v270, %v261
    %v278 = vadd.s32 %v273, %v275
    %vm279 = vc.u32 %v273, %v275
    %v280 = vadd.s32 %v276, 1
    %v281 = vsel %vm279, %v280, %v276
    %v282 = vadd.s32 %v277, %v281
    %v283 = vadd.s32 %v282, 536870912
    %v284 = vshrl.u32 %v283, 30
    %v285 = vshll.u32 %v284, 30
    %v286 = vsub.s32 %v282, %v285
    %vm287 = vcmp.lt.s32.totalorder %v286, 0
    %v288 = vsub.s32 0, %v286
    %v289 = vsel %vm287, %v288, %v286
    %v290 = vclz %v289
    %v291 = vsub.s32 %v290, 2
    %vm292 = vcmp.gt.s32.totalorder 0, %v291
    %v293 = vsel %vm292, 0, %v291
    %v294 = vsub.s32 32, %v293
    %v295 = vshll.u32 %v286, %v293
    %v296 = vshrl.u32 %v278, %v294
    %v297 = vor.u32 %v295, %v296
    %v298 = vsub.s32 4294967266, %v293
    %v299 = vadd.s32 %v298, 127
    %v300 = vshll.u32 %v299, 23
    %v301 = vor.u32 4788187, %v300
    %v302 = vand.u32 2147483647, %v301
    %v304 = vcvt.s32.f32 %v297
    %v305 = vmul.f32 %v304, %v302
    %v306 = vxor.u32 %v305, 2147483648
    %v307 = vsel %vm224, %v306, %v305
    %v308 = vsub.s32 4, %v284
    %v309 = vsel %vm224, %v308, %v284
    %v310 = vsel %vm223, %v111, %v307
    %v311 = vsel %vm223, 0, %v309
    %v312 = vcosq.f32.pop %v310
    %v313 = vsinq.f32.pop %v310
    %vm314 = vweird.f32 %v111
    %v315 = vadd.s32 %v311, 3
    %v316 = vand.u32 %v315, 3
    %vm317 = vcmp.lt.s32.totalorder %v316, 2
    %vm318 = vcmp.eq.s32.totalorder %v316, 0
    %v319 = vxor.u32 %v313, 2147483648
    %v320 = vsel %vm318, %v312, %v319
    %vm321 = vcmp.eq.s32.totalorder %v316, 2
    %v322 = vxor.u32 %v312, 2147483648
    %v323 = vsel %vm321, %v322, %v313
    %v324 = vsel %vm317, %v320, %v323
    %v325 = vsel %vm314, nan, %v324
    %v326 = vand.u32 2147483647, %v112
    %vm327 = vcmp.le.f32.partialorder %v326, 0.7853982
    %vm328 = vcmp.lt.s32.totalorder %v112, 0
    %v329 = vand.u32 %v112, 2139095040
    %v330 = vshrl.u32 %v329, 23
    %v331 = vsub.s32 %v330, 127
    %v332 = vand.u32 2147483647, %v112
    %v333 = vand.u32 %v332, 8388607
    %v334 = vor.u32 %v333, 8388608
    %v335 = vsub.s32 0, %v334
    %v336 = vadd.s32 %v331, 1
    %vm337 = vcmp.gt.s32.totalorder %v336, 0
    %v338 = vsel %vm337, %v336, 0
    %v339 = vshrl.u32 %v338, 5
    %v340 = vand.u32 %v338, 31
    %v341 = vsub.s32 32, %v340
    %v342 = vshrl.u32 683565275, %v341
    %v343 = vshll.u32 683565275, %v340
    %v344 = vshrl.u32 2475754826, %v341
    %v345 = vor.u32 %v343, %v344
    %v346 = vshll.u32 2475754826, %v340
    %v347 = vshrl.u32 2131351028, %v341
    %v348 = vor.u32 %v346, %v347
    %v349 = vshll.u32 2131351028, %v340
    %v350 = vshrl.u32 2102212464, %v341
    %v351 = vor.u32 %v349, %v350
    %v352 = vshll.u32 2102212464, %v340
    %v353 = vshrl.u32 920167782, %v341
    %v354 = vor.u32 %v352, %v353
    %v355 = vshll.u32 920167782, %v340
    %v356 = vshrl.u32 1326507024, %v341
    %v357 = vor.u32 %v355, %v356
    %vm358 = vcmp.lt.s32.totalorder %v339, 1
    %vm359 = vcmp.lt.s32.totalorder %v339, 2
    %vm360 = vcmp.lt.s32.totalorder %v339, 3
    %vm361 = vcmp.lt.s32.totalorder %v339, 4
    %v362 = vsel %vm358, %v342, %v345
    %v363 = vsel %vm361, %v351, 2102212464
    %v364 = vsel %vm360, %v348, %v363
    %v365 = vsel %vm359, %v362, %v364
    %v366 = vsel %vm358, %v345, %v348
    %v367 = vsel %vm361, %v354, 920167782
    %v368 = vsel %vm360, %v351, %v367
    %v369 = vsel %vm359, %v366, %v368
    %v370 = vsel %vm358, %v348, %v351
    %v371 = vsel %vm361, %v357, 1326507024
    %v372 = vsel %vm360, %v354, %v371
    %v373 = vsel %vm359, %v370, %v372
    %v374 = vshll.u32 %v334, 8
    %v375 = vmul.u32.u64.compose %v374, %v373
    %v376 = vextract.low.u32 %v375
    %v377 = vextract.high.u32 %v375
    %v378 = vmul.u32.u64.compose %v374, %v369
    %v379 = vextract.low.u32 %v378
    %v380 = vextract.high.u32 %v378
    %v381 = vmul.u32 %v374, %v365
    %v382 = vadd.s32 %v377, %v379
    %vm383 = vc.u32 %v377, %v379
    %v384 = vadd.s32 %v380, 1
    %v385 = vsel %vm383, %v384, %v380
    %v386 = vadd.s32 %v381, %v385
    %v387 = vadd.s32 %v386, 536870912
    %v388 = vshrl.u32 %v387, 30
    %v389 = vshll.u32 %v388, 30
    %v390 = vsub.s32 %v386, %v389
    %vm391 = vcmp.lt.s32.totalorder %v390, 0
    %v392 = vsub.s32 0, %v390
    %v393 = vsel %vm391, %v392, %v390
    %v394 = vclz %v393
    %v395 = vsub.s32 %v394, 2
    %vm396 = vcmp.gt.s32.totalorder 0, %v395
    %v397 = vsel %vm396, 0, %v395
    %v398 = vsub.s32 32, %v397
    %v399 = vshll.u32 %v390, %v397
    %v400 = vshrl.u32 %v382, %v398
    %v401 = vor.u32 %v399, %v400
    %v402 = vsub.s32 4294967266, %v397
    %v403 = vadd.s32 %v402, 127
    %v404 = vshll.u32 %v403, 23
    %v405 = vor.u32 4788187, %v404
    %v406 = vand.u32 2147483647, %v405
    %v408 = vcvt.s32.f32 %v401
    %v409 = vmul.f32 %v408, %v406
    %v410 = vxor.u32 %v409, 2147483648
    %v411 = vsel %vm328, %v410, %v409
    %v412 = vsub.s32 4, %v388
    %v413 = vsel %vm328, %v412, %v388
    %v414 = vsel %vm327, %v112, %v411
    %v415 = vsel %vm327, 0, %v413
    %v416 = vcosq.f32.pop %v414
    %v417 = vsinq.f32.pop %v414
    %vm418 = vweird.f32 %v112
    %v419 = vadd.s32 %v415, 3
    %v420 = vand.u32 %v419, 3
    %vm421 = vcmp.lt.s32.totalorder %v420, 2
    %vm422 = vcmp.eq.s32.totalorder %v420, 0
    %v423 = vxor.u32 %v417, 2147483648
    %v424 = vsel %vm422, %v416, %v423
    %vm425 = vcmp.eq.s32.totalorder %v420, 2
    %v426 = vxor.u32 %v416, 2147483648
    %v427 = vsel %vm425, %v426, %v417
    %v428 = vsel %vm421, %v424, %v427
    %v429 = vsel %vm418, nan, %v428
    %v430 = vand.u32 2147483647, %v113
    %vm431 = vcmp.le.f32.partialorder %v430, 0.7853982
    %vm432 = vcmp.lt.s32.totalorder %v113, 0
    %v433 = vand.u32 %v113, 2139095040
    %v434 = vshrl.u32 %v433, 23
    %v435 = vsub.s32 %v434, 127
    %v436 = vand.u32 2147483647, %v113
    %v437 = vand.u32 %v436, 8388607
    %v438 = vor.u32 %v437, 8388608
    %v439 = vsub.s32 0, %v438
    %v440 = vadd.s32 %v435, 1
    %vm441 = vcmp.gt.s32.totalorder %v440, 0
    %v442 = vsel %vm441, %v440, 0
    %v443 = vshrl.u32 %v442, 5
    %v444 = vand.u32 %v442, 31
    %v445 = vsub.s32 32, %v444
    %v446 = vshrl.u32 683565275, %v445
    %v447 = vshll.u32 683565275, %v444
    %v448 = vshrl.u32 2475754826, %v445
    %v449 = vor.u32 %v447, %v448
    %v450 = vshll.u32 2475754826, %v444
    %v451 = vshrl.u32 2131351028, %v445
    %v452 = vor.u32 %v450, %v451
    %v453 = vshll.u32 2131351028, %v444
    %v454 = vshrl.u32 2102212464, %v445
    %v455 = vor.u32 %v453, %v454
    %v456 = vshll.u32 2102212464, %v444
    %v457 = vshrl.u32 920167782, %v445
    %v458 = vor.u32 %v456, %v457
    %v459 = vshll.u32 920167782, %v444
    %v460 = vshrl.u32 1326507024, %v445
    %v461 = vor.u32 %v459, %v460
    %vm462 = vcmp.lt.s32.totalorder %v443, 1
    %vm463 = vcmp.lt.s32.totalorder %v443, 2
    %vm464 = vcmp.lt.s32.totalorder %v443, 3
    %vm465 = vcmp.lt.s32.totalorder %v443, 4
    %v466 = vsel %vm462, %v446, %v449
    %v467 = vsel %vm465, %v455, 2102212464
    %v468 = vsel %vm464, %v452, %v467
    %v469 = vsel %vm463, %v466, %v468
    %v470 = vsel %vm462, %v449, %v452
    %v471 = vsel %vm465, %v458, 920167782
    %v472 = vsel %vm464, %v455, %v471
    %v473 = vsel %vm463, %v470, %v472
    %v474 = vsel %vm462, %v452, %v455
    %v475 = vsel %vm465, %v461, 1326507024
    %v476 = vsel %vm464, %v458, %v475
    %v477 = vsel %vm463, %v474, %v476
    %v478 = vshll.u32 %v438, 8
    %v479 = vmul.u32.u64.compose %v478, %v477
    %v480 = vextract.low.u32 %v479
    %v481 = vextract.high.u32 %v479
    %v482 = vmul.u32.u64.compose %v478, %v473
    %v483 = vextract.low.u32 %v482
    %v484 = vextract.high.u32 %v482
    %v485 = vmul.u32 %v478, %v469
    %v486 = vadd.s32 %v481, %v483
    %vm487 = vc.u32 %v481, %v483
    %v488 = vadd.s32 %v484, 1
    %v489 = vsel %vm487, %v488, %v484
    %v490 = vadd.s32 %v485, %v489
    %v491 = vadd.s32 %v490, 536870912
    %v492 = vshrl.u32 %v491, 30
    %v493 = vshll.u32 %v492, 30
    %v494 = vsub.s32 %v490, %v493
    %vm495 = vcmp.lt.s32.totalorder %v494, 0
    %v496 = vsub.s32 0, %v494
    %v497 = vsel %vm495, %v496, %v494
    %v498 = vclz %v497
    %v499 = vsub.s32 %v498, 2
    %vm500 = vcmp.gt.s32.totalorder 0, %v499
    %v501 = vsel %vm500, 0, %v499
    %v502 = vsub.s32 32, %v501
    %v503 = vshll.u32 %v494, %v501
    %v504 = vshrl.u32 %v486, %v502
    %v505 = vor.u32 %v503, %v504
    %v506 = vsub.s32 4294967266, %v501
    %v507 = vadd.s32 %v506, 127
    %v508 = vshll.u32 %v507, 23
    %v509 = vor.u32 4788187, %v508
    %v510 = vand.u32 2147483647, %v509
    %v512 = vcvt.s32.f32 %v505
    %v513 = vmul.f32 %v512, %v510
    %v514 = vxor.u32 %v513, 2147483648
    %v515 = vsel %vm432, %v514, %v513
    %v516 = vsub.s32 4, %v492
    %v517 = vsel %vm432, %v516, %v492
    %v518 = vsel %vm431, %v113, %v515
    %v519 = vsel %vm431, 0, %v517
    %v520 = vcosq.f32.pop %v518
    %v521 = vsinq.f32.pop %v518
    %vm522 = vweird.f32 %v113
    %v523 = vadd.s32 %v519, 3
    %v524 = vand.u32 %v523, 3
    %vm525 = vcmp.lt.s32.totalorder %v524, 2
    %vm526 = vcmp.eq.s32.totalorder %v524, 0
    %v527 = vxor.u32 %v521, 2147483648
    %v528 = vsel %vm526, %v520, %v527
    %vm529 = vcmp.eq.s32.totalorder %v524, 2
    %v530 = vxor.u32 %v520, 2147483648
    %v531 = vsel %vm529, %v530, %v521
    %v532 = vsel %vm525, %v528, %v531
    %v533 = vsel %vm522, nan, %v532
    %v534 = vand.u32 2147483647, %v114
    %vm535 = vcmp.le.f32.partialorder %v534, 0.7853982
    %vm536 = vcmp.lt.s32.totalorder %v114, 0
    %v537 = vand.u32 %v114, 2139095040
    %v538 = vshrl.u32 %v537, 23
    %v539 = vsub.s32 %v538, 127
    %v540 = vand.u32 2147483647, %v114
    %v541 = vand.u32 %v540, 8388607
    %v542 = vor.u32 %v541, 8388608
    %v543 = vsub.s32 0, %v542
    %v544 = vadd.s32 %v539, 1
    %vm545 = vcmp.gt.s32.totalorder %v544, 0
    %v546 = vsel %vm545, %v544, 0
    %v547 = vshrl.u32 %v546, 5
    %v548 = vand.u32 %v546, 31
    %v549 = vsub.s32 32, %v548
    %v550 = vshrl.u32 683565275, %v549
    %v551 = vshll.u32 683565275, %v548
    %v552 = vshrl.u32 2475754826, %v549
    %v553 = vor.u32 %v551, %v552
    %v554 = vshll.u32 2475754826, %v548
    %v555 = vshrl.u32 2131351028, %v549
    %v556 = vor.u32 %v554, %v555
    %v557 = vshll.u32 2131351028, %v548
    %v558 = vshrl.u32 2102212464, %v549
    %v559 = vor.u32 %v557, %v558
    %v560 = vshll.u32 2102212464, %v548
    %v561 = vshrl.u32 920167782, %v549
    %v562 = vor.u32 %v560, %v561
    %v563 = vshll.u32 920167782, %v548
    %v564 = vshrl.u32 1326507024, %v549
    %v565 = vor.u32 %v563, %v564
    %vm566 = vcmp.lt.s32.totalorder %v547, 1
    %vm567 = vcmp.lt.s32.totalorder %v547, 2
    %vm568 = vcmp.lt.s32.totalorder %v547, 3
    %vm569 = vcmp.lt.s32.totalorder %v547, 4
    %v570 = vsel %vm566, %v550, %v553
    %v571 = vsel %vm569, %v559, 2102212464
    %v572 = vsel %vm568, %v556, %v571
    %v573 = vsel %vm567, %v570, %v572
    %v574 = vsel %vm566, %v553, %v556
    %v575 = vsel %vm569, %v562, 920167782
    %v576 = vsel %vm568, %v559, %v575
    %v577 = vsel %vm567, %v574, %v576
    %v578 = vsel %vm566, %v556, %v559
    %v579 = vsel %vm569, %v565, 1326507024
    %v580 = vsel %vm568, %v562, %v579
    %v581 = vsel %vm567, %v578, %v580
    %v582 = vshll.u32 %v542, 8
    %v583 = vmul.u32.u64.compose %v582, %v581
    %v584 = vextract.low.u32 %v583
    %v585 = vextract.high.u32 %v583
    %v586 = vmul.u32.u64.compose %v582, %v577
    %v587 = vextract.low.u32 %v586
    %v588 = vextract.high.u32 %v586
    %v589 = vmul.u32 %v582, %v573
    %v590 = vadd.s32 %v585, %v587
    %vm591 = vc.u32 %v585, %v587
    %v592 = vadd.s32 %v588, 1
    %v593 = vsel %vm591, %v592, %v588
    %v594 = vadd.s32 %v589, %v593
    %v595 = vadd.s32 %v594, 536870912
    %v596 = vshrl.u32 %v595, 30
    %v597 = vshll.u32 %v596, 30
    %v598 = vsub.s32 %v594, %v597
    %vm599 = vcmp.lt.s32.totalorder %v598, 0
    %v600 = vsub.s32 0, %v598
    %v601 = vsel %vm599, %v600, %v598
    %v602 = vclz %v601
    %v603 = vsub.s32 %v602, 2
    %vm604 = vcmp.gt.s32.totalorder 0, %v603
    %v605 = vsel %vm604, 0, %v603
    %v606 = vsub.s32 32, %v605
    %v607 = vshll.u32 %v598, %v605
    %v608 = vshrl.u32 %v590, %v606
    %v609 = vor.u32 %v607, %v608
    %v610 = vsub.s32 4294967266, %v605
    %v611 = vadd.s32 %v610, 127
    %v612 = vshll.u32 %v611, 23
    %v613 = vor.u32 4788187, %v612
    %v614 = vand.u32 2147483647, %v613
    %v616 = vcvt.s32.f32 %v609
    %v617 = vmul.f32 %v616, %v614
    %v618 = vxor.u32 %v617, 2147483648
    %v619 = vsel %vm536, %v618, %v617
    %v620 = vsub.s32 4, %v596
    %v621 = vsel %vm536, %v620, %v596
    %v622 = vsel %vm535, %v114, %v619
    %v623 = vsel %vm535, 0, %v621
    %v624 = vcosq.f32.pop %v622
    %v625 = vsinq.f32.pop %v622
    %vm626 = vweird.f32 %v114
    %v627 = vadd.s32 %v623, 3
    %v628 = vand.u32 %v627, 3
    %vm629 = vcmp.lt.s32.totalorder %v628, 2
    %vm630 = vcmp.eq.s32.totalorder %v628, 0
    %v631 = vxor.u32 %v625, 2147483648
    %v632 = vsel %vm630, %v624, %v631
    %vm633 = vcmp.eq.s32.totalorder %v628, 2
    %v634 = vxor.u32 %v624, 2147483648
    %v635 = vsel %vm633, %v634, %v625
    %v636 = vsel %vm629, %v632, %v635
    %v637 = vsel %vm626, nan, %v636
    %v638 = vand.u32 2147483647, %v115
    %vm639 = vcmp.le.f32.partialorder %v638, 0.7853982
    %vm640 = vcmp.lt.s32.totalorder %v115, 0
    %v641 = vand.u32 %v115, 2139095040
    %v642 = vshrl.u32 %v641, 23
    %v643 = vsub.s32 %v642, 127
    %v644 = vand.u32 2147483647, %v115
    %v645 = vand.u32 %v644, 8388607
    %v646 = vor.u32 %v645, 8388608
    %v647 = vsub.s32 0, %v646
    %v648 = vadd.s32 %v643, 1
    %vm649 = vcmp.gt.s32.totalorder %v648, 0
    %v650 = vsel %vm649, %v648, 0
    %v651 = vshrl.u32 %v650, 5
    %v652 = vand.u32 %v650, 31
    %v653 = vsub.s32 32, %v652
    %v654 = vshrl.u32 683565275, %v653
    %v655 = vshll.u32 683565275, %v652
    %v656 = vshrl.u32 2475754826, %v653
    %v657 = vor.u32 %v655, %v656
    %v658 = vshll.u32 2475754826, %v652
    %v659 = vshrl.u32 2131351028, %v653
    %v660 = vor.u32 %v658, %v659
    %v661 = vshll.u32 2131351028, %v652
    %v662 = vshrl.u32 2102212464, %v653
    %v663 = vor.u32 %v661, %v662
    %v664 = vshll.u32 2102212464, %v652
    %v665 = vshrl.u32 920167782, %v653
    %v666 = vor.u32 %v664, %v665
    %v667 = vshll.u32 920167782, %v652
    %v668 = vshrl.u32 1326507024, %v653
    %v669 = vor.u32 %v667, %v668
    %vm670 = vcmp.lt.s32.totalorder %v651, 1
    %vm671 = vcmp.lt.s32.totalorder %v651, 2
    %vm672 = vcmp.lt.s32.totalorder %v651, 3
    %vm673 = vcmp.lt.s32.totalorder %v651, 4
    %v674 = vsel %vm670, %v654, %v657
    %v675 = vsel %vm673, %v663, 2102212464
    %v676 = vsel %vm672, %v660, %v675
    %v677 = vsel %vm671, %v674, %v676
    %v678 = vsel %vm670, %v657, %v660
    %v679 = vsel %vm673, %v666, 920167782
    %v680 = vsel %vm672, %v663, %v679
    %v681 = vsel %vm671, %v678, %v680
    %v682 = vsel %vm670, %v660, %v663
    %v683 = vsel %vm673, %v669, 1326507024
    %v684 = vsel %vm672, %v666, %v683
    %v685 = vsel %vm671, %v682, %v684
    %v686 = vshll.u32 %v646, 8
    %v687 = vmul.u32.u64.compose %v686, %v685
    %v688 = vextract.low.u32 %v687
    %v689 = vextract.high.u32 %v687
    %v690 = vmul.u32.u64.compose %v686, %v681
    %v691 = vextract.low.u32 %v690
    %v692 = vextract.high.u32 %v690
    %v693 = vmul.u32 %v686, %v677
    %v694 = vadd.s32 %v689, %v691
    %vm695 = vc.u32 %v689, %v691
    %v696 = vadd.s32 %v692, 1
    %v697 = vsel %vm695, %v696, %v692
    %v698 = vadd.s32 %v693, %v697
    %v699 = vadd.s32 %v698, 536870912
    %v700 = vshrl.u32 %v699, 30
    %v701 = vshll.u32 %v700, 30
    %v702 = vsub.s32 %v698, %v701
    %vm703 = vcmp.lt.s32.totalorder %v702, 0
    %v704 = vsub.s32 0, %v702
    %v705 = vsel %vm703, %v704, %v702
    %v706 = vclz %v705
    %v707 = vsub.s32 %v706, 2
    %vm708 = vcmp.gt.s32.totalorder 0, %v707
    %v709 = vsel %vm708, 0, %v707
    %v710 = vsub.s32 32, %v709
    %v711 = vshll.u32 %v702, %v709
    %v712 = vshrl.u32 %v694, %v710
    %v713 = vor.u32 %v711, %v712
    %v714 = vsub.s32 4294967266, %v709
    %v715 = vadd.s32 %v714, 127
    %v716 = vshll.u32 %v715, 23
    %v717 = vor.u32 4788187, %v716
    %v718 = vand.u32 2147483647, %v717
    %v720 = vcvt.s32.f32 %v713
    %v721 = vmul.f32 %v720, %v718
    %v722 = vxor.u32 %v721, 2147483648
    %v723 = vsel %vm640, %v722, %v721
    %v724 = vsub.s32 4, %v700
    %v725 = vsel %vm640, %v724, %v700
    %v726 = vsel %vm639, %v115, %v723
    %v727 = vsel %vm639, 0, %v725
    %v728 = vcosq.f32.pop %v726
    %v729 = vsinq.f32.pop %v726
    %vm730 = vweird.f32 %v115
    %v731 = vadd.s32 %v727, 3
    %v732 = vand.u32 %v731, 3
    %vm733 = vcmp.lt.s32.totalorder %v732, 2
    %vm734 = vcmp.eq.s32.totalorder %v732, 0
    %v735 = vxor.u32 %v729, 2147483648
    %v736 = vsel %vm734, %v728, %v735
    %vm737 = vcmp.eq.s32.totalorder %v732, 2
    %v738 = vxor.u32 %v728, 2147483648
    %v739 = vsel %vm737, %v738, %v729
    %v740 = vsel %vm733, %v736, %v739
    %v741 = vsel %vm730, nan, %v740
    %v742 = vand.u32 2147483647, %v116
    %vm743 = vcmp.le.f32.partialorder %v742, 0.7853982
    %vm744 = vcmp.lt.s32.totalorder %v116, 0
    %v745 = vand.u32 %v116, 2139095040
    %v746 = vshrl.u32 %v745, 23
    %v747 = vsub.s32 %v746, 127
    %v748 = vand.u32 2147483647, %v116
    %v749 = vand.u32 %v748, 8388607
    %v750 = vor.u32 %v749, 8388608
    %v751 = vsub.s32 0, %v750
    %v752 = vadd.s32 %v747, 1
    %vm753 = vcmp.gt.s32.totalorder %v752, 0
    %v754 = vsel %vm753, %v752, 0
    %v755 = vshrl.u32 %v754, 5
    %v756 = vand.u32 %v754, 31
    %v757 = vsub.s32 32, %v756
    %v758 = vshrl.u32 683565275, %v757
    %v759 = vshll.u32 683565275, %v756
    %v760 = vshrl.u32 2475754826, %v757
    %v761 = vor.u32 %v759, %v760
    %v762 = vshll.u32 2475754826, %v756
    %v763 = vshrl.u32 2131351028, %v757
    %v764 = vor.u32 %v762, %v763
    %v765 = vshll.u32 2131351028, %v756
    %v766 = vshrl.u32 2102212464, %v757
    %v767 = vor.u32 %v765, %v766
    %v768 = vshll.u32 2102212464, %v756
    %v769 = vshrl.u32 920167782, %v757
    %v770 = vor.u32 %v768, %v769
    %v771 = vshll.u32 920167782, %v756
    %v772 = vshrl.u32 1326507024, %v757
    %v773 = vor.u32 %v771, %v772
    %vm774 = vcmp.lt.s32.totalorder %v755, 1
    %vm775 = vcmp.lt.s32.totalorder %v755, 2
    %vm776 = vcmp.lt.s32.totalorder %v755, 3
    %vm777 = vcmp.lt.s32.totalorder %v755, 4
    %v778 = vsel %vm774, %v758, %v761
    %v779 = vsel %vm777, %v767, 2102212464
    %v780 = vsel %vm776, %v764, %v779
    %v781 = vsel %vm775, %v778, %v780
    %v782 = vsel %vm774, %v761, %v764
    %v783 = vsel %vm777, %v770, 920167782
    %v784 = vsel %vm776, %v767, %v783
    %v785 = vsel %vm775, %v782, %v784
    %v786 = vsel %vm774, %v764, %v767
    %v787 = vsel %vm777, %v773, 1326507024
    %v788 = vsel %vm776, %v770, %v787
    %v789 = vsel %vm775, %v786, %v788
    %v790 = vshll.u32 %v750, 8
    %v791 = vmul.u32.u64.compose %v790, %v789
    %v792 = vextract.low.u32 %v791
    %v793 = vextract.high.u32 %v791
    %v794 = vmul.u32.u64.compose %v790, %v785
    %v795 = vextract.low.u32 %v794
    %v796 = vextract.high.u32 %v794
    %v797 = vmul.u32 %v790, %v781
    %v798 = vadd.s32 %v793, %v795
    %vm799 = vc.u32 %v793, %v795
    %v800 = vadd.s32 %v796, 1
    %v801 = vsel %vm799, %v800, %v796
    %v802 = vadd.s32 %v797, %v801
    %v803 = vadd.s32 %v802, 536870912
    %v804 = vshrl.u32 %v803, 30
    %v805 = vshll.u32 %v804, 30
    %v806 = vsub.s32 %v802, %v805
    %vm807 = vcmp.lt.s32.totalorder %v806, 0
    %v808 = vsub.s32 0, %v806
    %v809 = vsel %vm807, %v808, %v806
    %v810 = vclz %v809
    %v811 = vsub.s32 %v810, 2
    %vm812 = vcmp.gt.s32.totalorder 0, %v811
    %v813 = vsel %vm812, 0, %v811
    %v814 = vsub.s32 32, %v813
    %v815 = vshll.u32 %v806, %v813
    %v816 = vshrl.u32 %v798, %v814
    %v817 = vor.u32 %v815, %v816
    %v818 = vsub.s32 4294967266, %v813
    %v819 = vadd.s32 %v818, 127
    %v820 = vshll.u32 %v819, 23
    %v821 = vor.u32 4788187, %v820
    %v822 = vand.u32 2147483647, %v821
    %v824 = vcvt.s32.f32 %v817
    %v825 = vmul.f32 %v824, %v822
    %v826 = vxor.u32 %v825, 2147483648
    %v827 = vsel %vm744, %v826, %v825
    %v828 = vsub.s32 4, %v804
    %v829 = vsel %vm744, %v828, %v804
    %v830 = vsel %vm743, %v116, %v827
    %v831 = vsel %vm743, 0, %v829
    %v832 = vcosq.f32.pop %v830
    %v833 = vsinq.f32.pop %v830
    %vm834 = vweird.f32 %v116
    %v835 = vadd.s32 %v831, 3
    %v836 = vand.u32 %v835, 3
    %vm837 = vcmp.lt.s32.totalorder %v836, 2
    %vm838 = vcmp.eq.s32.totalorder %v836, 0
    %v839 = vxor.u32 %v833, 2147483648
    %v840 = vsel %vm838, %v832, %v839
    %vm841 = vcmp.eq.s32.totalorder %v836, 2
    %v842 = vxor.u32 %v832, 2147483648
    %v843 = vsel %vm841, %v842, %v833
    %v844 = vsel %vm837, %v840, %v843
    %v845 = vsel %vm834, nan, %v844
    %v846 = vand.u32 2147483647, %v117
    %vm847 = vcmp.le.f32.partialorder %v846, 0.7853982
    %vm848 = vcmp.lt.s32.totalorder %v117, 0
    %v849 = vand.u32 %v117, 2139095040
    %v850 = vshrl.u32 %v849, 23
    %v851 = vsub.s32 %v850, 127
    %v852 = vand.u32 2147483647, %v117
    %v853 = vand.u32 %v852, 8388607
    %v854 = vor.u32 %v853, 8388608
    %v855 = vsub.s32 0, %v854
    %v856 = vadd.s32 %v851, 1
    %vm857 = vcmp.gt.s32.totalorder %v856, 0
    %v858 = vsel %vm857, %v856, 0
    %v859 = vshrl.u32 %v858, 5
    %v860 = vand.u32 %v858, 31
    %v861 = vsub.s32 32, %v860
    %v862 = vshrl.u32 683565275, %v861
    %v863 = vshll.u32 683565275, %v860
    %v864 = vshrl.u32 2475754826, %v861
    %v865 = vor.u32 %v863, %v864
    %v866 = vshll.u32 2475754826, %v860
    %v867 = vshrl.u32 2131351028, %v861
    %v868 = vor.u32 %v866, %v867
    %v869 = vshll.u32 2131351028, %v860
    %v870 = vshrl.u32 2102212464, %v861
    %v871 = vor.u32 %v869, %v870
    %v872 = vshll.u32 2102212464, %v860
    %v873 = vshrl.u32 920167782, %v861
    %v874 = vor.u32 %v872, %v873
    %v875 = vshll.u32 920167782, %v860
    %v876 = vshrl.u32 1326507024, %v861
    %v877 = vor.u32 %v875, %v876
    %vm878 = vcmp.lt.s32.totalorder %v859, 1
    %vm879 = vcmp.lt.s32.totalorder %v859, 2
    %vm880 = vcmp.lt.s32.totalorder %v859, 3
    %vm881 = vcmp.lt.s32.totalorder %v859, 4
    %v882 = vsel %vm878, %v862, %v865
    %v883 = vsel %vm881, %v871, 2102212464
    %v884 = vsel %vm880, %v868, %v883
    %v885 = vsel %vm879, %v882, %v884
    %v886 = vsel %vm878, %v865, %v868
    %v887 = vsel %vm881, %v874, 920167782
    %v888 = vsel %vm880, %v871, %v887
    %v889 = vsel %vm879, %v886, %v888
    %v890 = vsel %vm878, %v868, %v871
    %v891 = vsel %vm881, %v877, 1326507024
    %v892 = vsel %vm880, %v874, %v891
    %v893 = vsel %vm879, %v890, %v892
    %v894 = vshll.u32 %v854, 8
    %v895 = vmul.u32.u64.compose %v894, %v893
    %v896 = vextract.low.u32 %v895
    %v897 = vextract.high.u32 %v895
    %v898 = vmul.u32.u64.compose %v894, %v889
    %v899 = vextract.low.u32 %v898
    %v900 = vextract.high.u32 %v898
    %v901 = vmul.u32 %v894, %v885
    %v902 = vadd.s32 %v897, %v899
    %vm903 = vc.u32 %v897, %v899
    %v904 = vadd.s32 %v900, 1
    %v905 = vsel %vm903, %v904, %v900
    %v906 = vadd.s32 %v901, %v905
    %v907 = vadd.s32 %v906, 536870912
    %v908 = vshrl.u32 %v907, 30
    %v909 = vshll.u32 %v908, 30
    %v910 = vsub.s32 %v906, %v909
    %vm911 = vcmp.lt.s32.totalorder %v910, 0
    %v912 = vsub.s32 0, %v910
    %v913 = vsel %vm911, %v912, %v910
    %v914 = vclz %v913
    %v915 = vsub.s32 %v914, 2
    %vm916 = vcmp.gt.s32.totalorder 0, %v915
    %v917 = vsel %vm916, 0, %v915
    %v918 = vsub.s32 32, %v917
    %v919 = vshll.u32 %v910, %v917
    %v920 = vshrl.u32 %v902, %v918
    %v921 = vor.u32 %v919, %v920
    %v922 = vsub.s32 4294967266, %v917
    %v923 = vadd.s32 %v922, 127
    %v924 = vshll.u32 %v923, 23
    %v925 = vor.u32 4788187, %v924
    %v926 = vand.u32 2147483647, %v925
    %v928 = vcvt.s32.f32 %v921
    %v929 = vmul.f32 %v928, %v926
    %v930 = vxor.u32 %v929, 2147483648
    %v931 = vsel %vm848, %v930, %v929
    %v932 = vsub.s32 4, %v908
    %v933 = vsel %vm848, %v932, %v908
    %v934 = vsel %vm847, %v117, %v931
    %v935 = vsel %vm847, 0, %v933
    %v936 = vcosq.f32.pop %v934
    %v937 = vsinq.f32.pop %v934
    %vm938 = vweird.f32 %v117
    %v939 = vadd.s32 %v935, 3
    %v940 = vand.u32 %v939, 3
    %vm941 = vcmp.lt.s32.totalorder %v940, 2
    %vm942 = vcmp.eq.s32.totalorder %v940, 0
    %v943 = vxor.u32 %v937, 2147483648
    %v944 = vsel %vm942, %v936, %v943
    %vm945 = vcmp.eq.s32.totalorder %v940, 2
    %v946 = vxor.u32 %v936, 2147483648
    %v947 = vsel %vm945, %v946, %v937
    %v948 = vsel %vm941, %v944, %v947
    %v949 = vsel %vm938, nan, %v948
    %950 = vst [vmem:[#allocation2] sm:$0xff] %v221
    %951 = vst [vmem:[#allocation2 + $0x8] sm:$0xff] %v325
    %952 = vst [vmem:[#allocation2 + $0x10] sm:$0xff] %v429
    %953 = vst [vmem:[#allocation2 + $0x18] sm:$0xff] %v533
    %954 = vst [vmem:[#allocation2 + $0x20] sm:$0xff] %v637
    %955 = vst [vmem:[#allocation2 + $0x28] sm:$0xff] %v741
    %956 = vst [vmem:[#allocation2 + $0x30] sm:$0xff] %v845
    %957 = vst [vmem:[#allocation2 + $0x38] sm:$0xff] %v949
    %959 = vset.pattern.permute.xlu0 0
    %960 = vperm.xlu0 %959, %v50
    %v961 = vpop.permute.xlu0 %960
    %964 = vset.pattern.permute.xlu0 0
    %965 = vperm.xlu0 %964, %v51
    %v966 = vpop.permute.xlu0 %965
    %969 = vset.pattern.permute.xlu0 0
    %970 = vperm.xlu0 %969, %v52
    %v971 = vpop.permute.xlu0 %970
    %974 = vset.pattern.permute.xlu0 0
    %975 = vperm.xlu0 %974, %v53
    %v976 = vpop.permute.xlu0 %975
    %v978 = vmul.f32 %v44, %v961
    %v979 = vmul.f32 %v45, %v961
    %v980 = vmul.f32 %v44, %v966
    %v981 = vmul.f32 %v45, %v966
    %v982 = vmul.f32 %v44, %v971
    %v983 = vmul.f32 %v45, %v971
    %v984 = vmul.f32 %v44, %v976
    %v985 = vmul.f32 %v45, %v976
    %987 = vset.pattern.permute.xlu0 0
    %988 = vperm.xlu0 %987, %v58
    %v989 = vpop.permute.xlu0 %988
    %992 = vset.pattern.permute.xlu0 0
    %993 = vperm.xlu0 %992, %v59
    %v994 = vpop.permute.xlu0 %993
    %997 = vset.pattern.permute.xlu0 0
    %998 = vperm.xlu0 %997, %v60
    %v999 = vpop.permute.xlu0 %998
    %1002 = vset.pattern.permute.xlu0 0
    %1003 = vperm.xlu0 %1002, %v61
    %v1004 = vpop.permute.xlu0 %1003
    %v1006 = vadd.f32 %v978, %v989
    %v1007 = vadd.f32 %v979, %v989
    %v1008 = vadd.f32 %v980, %v994
    %v1009 = vadd.f32 %v981, %v994
    %v1010 = vadd.f32 %v982, %v999
    %v1011 = vadd.f32 %v983, %v999
    %v1012 = vadd.f32 %v984, %v1004
    %v1013 = vadd.f32 %v985, %v1004
    %v1014 = vand.u32 2147483647, %v1006
    %vm1015 = vcmp.le.f32.partialorder %v1014, 0.7853982
    %vm1016 = vcmp.lt.s32.totalorder %v1006, 0
    %v1017 = vand.u32 %v1006, 2139095040
    %v1018 = vshrl.u32 %v1017, 23
    %v1019 = vsub.s32 %v1018, 127
    %v1020 = vand.u32 2147483647, %v1006
    %v1021 = vand.u32 %v1020, 8388607
    %v1022 = vor.u32 %v1021, 8388608
    %v1023 = vsub.s32 0, %v1022
    %v1024 = vadd.s32 %v1019, 1
    %vm1025 = vcmp.gt.s32.totalorder %v1024, 0
    %v1026 = vsel %vm1025, %v1024, 0
    %v1027 = vshrl.u32 %v1026, 5
    %v1028 = vand.u32 %v1026, 31
    %v1029 = vsub.s32 32, %v1028
    %v1030 = vshrl.u32 683565275, %v1029
    %v1031 = vshll.u32 683565275, %v1028
    %v1032 = vshrl.u32 2475754826, %v1029
    %v1033 = vor.u32 %v1031, %v1032
    %v1034 = vshll.u32 2475754826, %v1028
    %v1035 = vshrl.u32 2131351028, %v1029
    %v1036 = vor.u32 %v1034, %v1035
    %v1037 = vshll.u32 2131351028, %v1028
    %v1038 = vshrl.u32 2102212464, %v1029
    %v1039 = vor.u32 %v1037, %v1038
    %v1040 = vshll.u32 2102212464, %v1028
    %v1041 = vshrl.u32 920167782, %v1029
    %v1042 = vor.u32 %v1040, %v1041
    %v1043 = vshll.u32 920167782, %v1028
    %v1044 = vshrl.u32 1326507024, %v1029
    %v1045 = vor.u32 %v1043, %v1044
    %vm1046 = vcmp.lt.s32.totalorder %v1027, 1
    %vm1047 = vcmp.lt.s32.totalorder %v1027, 2
    %vm1048 = vcmp.lt.s32.totalorder %v1027, 3
    %vm1049 = vcmp.lt.s32.totalorder %v1027, 4
    %v1050 = vsel %vm1046, %v1030, %v1033
    %v1051 = vsel %vm1049, %v1039, 2102212464
    %v1052 = vsel %vm1048, %v1036, %v1051
    %v1053 = vsel %vm1047, %v1050, %v1052
    %v1054 = vsel %vm1046, %v1033, %v1036
    %v1055 = vsel %vm1049, %v1042, 920167782
    %v1056 = vsel %vm1048, %v1039, %v1055
    %v1057 = vsel %vm1047, %v1054, %v1056
    %v1058 = vsel %vm1046, %v1036, %v1039
    %v1059 = vsel %vm1049, %v1045, 1326507024
    %v1060 = vsel %vm1048, %v1042, %v1059
    %v1061 = vsel %vm1047, %v1058, %v1060
    %v1062 = vshll.u32 %v1022, 8
    %v1063 = vmul.u32.u64.compose %v1062, %v1061
    %v1064 = vextract.low.u32 %v1063
    %v1065 = vextract.high.u32 %v1063
    %v1066 = vmul.u32.u64.compose %v1062, %v1057
    %v1067 = vextract.low.u32 %v1066
    %v1068 = vextract.high.u32 %v1066
    %v1069 = vmul.u32 %v1062, %v1053
    %v1070 = vadd.s32 %v1065, %v1067
    %vm1071 = vc.u32 %v1065, %v1067
    %v1072 = vadd.s32 %v1068, 1
    %v1073 = vsel %vm1071, %v1072, %v1068
    %v1074 = vadd.s32 %v1069, %v1073
    %v1075 = vadd.s32 %v1074, 536870912
    %v1076 = vshrl.u32 %v1075, 30
    %v1077 = vshll.u32 %v1076, 30
    %v1078 = vsub.s32 %v1074, %v1077
    %vm1079 = vcmp.lt.s32.totalorder %v1078, 0
    %v1080 = vsub.s32 0, %v1078
    %v1081 = vsel %vm1079, %v1080, %v1078
    %v1082 = vclz %v1081
    %v1083 = vsub.s32 %v1082, 2
    %vm1084 = vcmp.gt.s32.totalorder 0, %v1083
    %v1085 = vsel %vm1084, 0, %v1083
    %v1086 = vsub.s32 32, %v1085
    %v1087 = vshll.u32 %v1078, %v1085
    %v1088 = vshrl.u32 %v1070, %v1086
    %v1089 = vor.u32 %v1087, %v1088
    %v1090 = vsub.s32 4294967266, %v1085
    %v1091 = vadd.s32 %v1090, 127
    %v1092 = vshll.u32 %v1091, 23
    %v1093 = vor.u32 4788187, %v1092
    %v1094 = vand.u32 2147483647, %v1093
    %v1096 = vcvt.s32.f32 %v1089
    %v1097 = vmul.f32 %v1096, %v1094
    %v1098 = vxor.u32 %v1097, 2147483648
    %v1099 = vsel %vm1016, %v1098, %v1097
    %v1100 = vsub.s32 4, %v1076
    %v1101 = vsel %vm1016, %v1100, %v1076
    %v1102 = vsel %vm1015, %v1006, %v1099
    %v1103 = vsel %vm1015, 0, %v1101
    %v1104 = vcosq.f32.pop %v1102
    %v1105 = vsinq.f32.pop %v1102
    %vm1106 = vweird.f32 %v1006
    %v1107 = vadd.s32 %v1103, 3
    %v1108 = vand.u32 %v1107, 3
    %vm1109 = vcmp.lt.s32.totalorder %v1108, 2
    %vm1110 = vcmp.eq.s32.totalorder %v1108, 0
    %v1111 = vxor.u32 %v1105, 2147483648
    %v1112 = vsel %vm1110, %v1104, %v1111
    %vm1113 = vcmp.eq.s32.totalorder %v1108, 2
    %v1114 = vxor.u32 %v1104, 2147483648
    %v1115 = vsel %vm1113, %v1114, %v1105
    %v1116 = vsel %vm1109, %v1112, %v1115
    %v1117 = vsel %vm1106, nan, %v1116
    %v1118 = vand.u32 2147483647, %v1007
    %vm1119 = vcmp.le.f32.partialorder %v1118, 0.7853982
    %vm1120 = vcmp.lt.s32.totalorder %v1007, 0
    %v1121 = vand.u32 %v1007, 2139095040
    %v1122 = vshrl.u32 %v1121, 23
    %v1123 = vsub.s32 %v1122, 127
    %v1124 = vand.u32 2147483647, %v1007
    %v1125 = vand.u32 %v1124, 8388607
    %v1126 = vor.u32 %v1125, 8388608
    %v1127 = vsub.s32 0, %v1126
    %v1128 = vadd.s32 %v1123, 1
    %vm1129 = vcmp.gt.s32.totalorder %v1128, 0
    %v1130 = vsel %vm1129, %v1128, 0
    %v1131 = vshrl.u32 %v1130, 5
    %v1132 = vand.u32 %v1130, 31
    %v1133 = vsub.s32 32, %v1132
    %v1134 = vshrl.u32 683565275, %v1133
    %v1135 = vshll.u32 683565275, %v1132
    %v1136 = vshrl.u32 2475754826, %v1133
    %v1137 = vor.u32 %v1135, %v1136
    %v1138 = vshll.u32 2475754826, %v1132
    %v1139 = vshrl.u32 2131351028, %v1133
    %v1140 = vor.u32 %v1138, %v1139
    %v1141 = vshll.u32 2131351028, %v1132
    %v1142 = vshrl.u32 2102212464, %v1133
    %v1143 = vor.u32 %v1141, %v1142
    %v1144 = vshll.u32 2102212464, %v1132
    %v1145 = vshrl.u32 920167782, %v1133
    %v1146 = vor.u32 %v1144, %v1145
    %v1147 = vshll.u32 920167782, %v1132
    %v1148 = vshrl.u32 1326507024, %v1133
    %v1149 = vor.u32 %v1147, %v1148
    %vm1150 = vcmp.lt.s32.totalorder %v1131, 1
    %vm1151 = vcmp.lt.s32.totalorder %v1131, 2
    %vm1152 = vcmp.lt.s32.totalorder %v1131, 3
    %vm1153 = vcmp.lt.s32.totalorder %v1131, 4
    %v1154 = vsel %vm1150, %v1134, %v1137
    %v1155 = vsel %vm1153, %v1143, 2102212464
    %v1156 = vsel %vm1152, %v1140, %v1155
    %v1157 = vsel %vm1151, %v1154, %v1156
    %v1158 = vsel %vm1150, %v1137, %v1140
    %v1159 = vsel %vm1153, %v1146, 920167782
    %v1160 = vsel %vm1152, %v1143, %v1159
    %v1161 = vsel %vm1151, %v1158, %v1160
    %v1162 = vsel %vm1150, %v1140, %v1143
    %v1163 = vsel %vm1153, %v1149, 1326507024
    %v1164 = vsel %vm1152, %v1146, %v1163
    %v1165 = vsel %vm1151, %v1162, %v1164
    %v1166 = vshll.u32 %v1126, 8
    %v1167 = vmul.u32.u64.compose %v1166, %v1165
    %v1168 = vextract.low.u32 %v1167
    %v1169 = vextract.high.u32 %v1167
    %v1170 = vmul.u32.u64.compose %v1166, %v1161
    %v1171 = vextract.low.u32 %v1170
    %v1172 = vextract.high.u32 %v1170
    %v1173 = vmul.u32 %v1166, %v1157
    %v1174 = vadd.s32 %v1169, %v1171
    %vm1175 = vc.u32 %v1169, %v1171
    %v1176 = vadd.s32 %v1172, 1
    %v1177 = vsel %vm1175, %v1176, %v1172
    %v1178 = vadd.s32 %v1173, %v1177
    %v1179 = vadd.s32 %v1178, 536870912
    %v1180 = vshrl.u32 %v1179, 30
    %v1181 = vshll.u32 %v1180, 30
    %v1182 = vsub.s32 %v1178, %v1181
    %vm1183 = vcmp.lt.s32.totalorder %v1182, 0
    %v1184 = vsub.s32 0, %v1182
    %v1185 = vsel %vm1183, %v1184, %v1182
    %v1186 = vclz %v1185
    %v1187 = vsub.s32 %v1186, 2
    %vm1188 = vcmp.gt.s32.totalorder 0, %v1187
    %v1189 = vsel %vm1188, 0, %v1187
    %v1190 = vsub.s32 32, %v1189
    %v1191 = vshll.u32 %v1182, %v1189
    %v1192 = vshrl.u32 %v1174, %v1190
    %v1193 = vor.u32 %v1191, %v1192
    %v1194 = vsub.s32 4294967266, %v1189
    %v1195 = vadd.s32 %v1194, 127
    %v1196 = vshll.u32 %v1195, 23
    %v1197 = vor.u32 4788187, %v1196
    %v1198 = vand.u32 2147483647, %v1197
    %v1200 = vcvt.s32.f32 %v1193
    %v1201 = vmul.f32 %v1200, %v1198
    %v1202 = vxor.u32 %v1201, 2147483648
    %v1203 = vsel %vm1120, %v1202, %v1201
    %v1204 = vsub.s32 4, %v1180
    %v1205 = vsel %vm1120, %v1204, %v1180
    %v1206 = vsel %vm1119, %v1007, %v1203
    %v1207 = vsel %vm1119, 0, %v1205
    %v1208 = vcosq.f32.pop %v1206
    %v1209 = vsinq.f32.pop %v1206
    %vm1210 = vweird.f32 %v1007
    %v1211 = vadd.s32 %v1207, 3
    %v1212 = vand.u32 %v1211, 3
    %vm1213 = vcmp.lt.s32.totalorder %v1212, 2
    %vm1214 = vcmp.eq.s32.totalorder %v1212, 0
    %v1215 = vxor.u32 %v1209, 2147483648
    %v1216 = vsel %vm1214, %v1208, %v1215
    %vm1217 = vcmp.eq.s32.totalorder %v1212, 2
    %v1218 = vxor.u32 %v1208, 2147483648
    %v1219 = vsel %vm1217, %v1218, %v1209
    %v1220 = vsel %vm1213, %v1216, %v1219
    %v1221 = vsel %vm1210, nan, %v1220
    %v1222 = vand.u32 2147483647, %v1008
    %vm1223 = vcmp.le.f32.partialorder %v1222, 0.7853982
    %vm1224 = vcmp.lt.s32.totalorder %v1008, 0
    %v1225 = vand.u32 %v1008, 2139095040
    %v1226 = vshrl.u32 %v1225, 23
    %v1227 = vsub.s32 %v1226, 127
    %v1228 = vand.u32 2147483647, %v1008
    %v1229 = vand.u32 %v1228, 8388607
    %v1230 = vor.u32 %v1229, 8388608
    %v1231 = vsub.s32 0, %v1230
    %v1232 = vadd.s32 %v1227, 1
    %vm1233 = vcmp.gt.s32.totalorder %v1232, 0
    %v1234 = vsel %vm1233, %v1232, 0
    %v1235 = vshrl.u32 %v1234, 5
    %v1236 = vand.u32 %v1234, 31
    %v1237 = vsub.s32 32, %v1236
    %v1238 = vshrl.u32 683565275, %v1237
    %v1239 = vshll.u32 683565275, %v1236
    %v1240 = vshrl.u32 2475754826, %v1237
    %v1241 = vor.u32 %v1239, %v1240
    %v1242 = vshll.u32 2475754826, %v1236
    %v1243 = vshrl.u32 2131351028, %v1237
    %v1244 = vor.u32 %v1242, %v1243
    %v1245 = vshll.u32 2131351028, %v1236
    %v1246 = vshrl.u32 2102212464, %v1237
    %v1247 = vor.u32 %v1245, %v1246
    %v1248 = vshll.u32 2102212464, %v1236
    %v1249 = vshrl.u32 920167782, %v1237
    %v1250 = vor.u32 %v1248, %v1249
    %v1251 = vshll.u32 920167782, %v1236
    %v1252 = vshrl.u32 1326507024, %v1237
    %v1253 = vor.u32 %v1251, %v1252
    %vm1254 = vcmp.lt.s32.totalorder %v1235, 1
    %vm1255 = vcmp.lt.s32.totalorder %v1235, 2
    %vm1256 = vcmp.lt.s32.totalorder %v1235, 3
    %vm1257 = vcmp.lt.s32.totalorder %v1235, 4
    %v1258 = vsel %vm1254, %v1238, %v1241
    %v1259 = vsel %vm1257, %v1247, 2102212464
    %v1260 = vsel %vm1256, %v1244, %v1259
    %v1261 = vsel %vm1255, %v1258, %v1260
    %v1262 = vsel %vm1254, %v1241, %v1244
    %v1263 = vsel %vm1257, %v1250, 920167782
    %v1264 = vsel %vm1256, %v1247, %v1263
    %v1265 = vsel %vm1255, %v1262, %v1264
    %v1266 = vsel %vm1254, %v1244, %v1247
    %v1267 = vsel %vm1257, %v1253, 1326507024
    %v1268 = vsel %vm1256, %v1250, %v1267
    %v1269 = vsel %vm1255, %v1266, %v1268
    %v1270 = vshll.u32 %v1230, 8
    %v1271 = vmul.u32.u64.compose %v1270, %v1269
    %v1272 = vextract.low.u32 %v1271
    %v1273 = vextract.high.u32 %v1271
    %v1274 = vmul.u32.u64.compose %v1270, %v1265
    %v1275 = vextract.low.u32 %v1274
    %v1276 = vextract.high.u32 %v1274
    %v1277 = vmul.u32 %v1270, %v1261
    %v1278 = vadd.s32 %v1273, %v1275
    %vm1279 = vc.u32 %v1273, %v1275
    %v1280 = vadd.s32 %v1276, 1
    %v1281 = vsel %vm1279, %v1280, %v1276
    %v1282 = vadd.s32 %v1277, %v1281
    %v1283 = vadd.s32 %v1282, 536870912
    %v1284 = vshrl.u32 %v1283, 30
    %v1285 = vshll.u32 %v1284, 30
    %v1286 = vsub.s32 %v1282, %v1285
    %vm1287 = vcmp.lt.s32.totalorder %v1286, 0
    %v1288 = vsub.s32 0, %v1286
    %v1289 = vsel %vm1287, %v1288, %v1286
    %v1290 = vclz %v1289
    %v1291 = vsub.s32 %v1290, 2
    %vm1292 = vcmp.gt.s32.totalorder 0, %v1291
    %v1293 = vsel %vm1292, 0, %v1291
    %v1294 = vsub.s32 32, %v1293
    %v1295 = vshll.u32 %v1286, %v1293
    %v1296 = vshrl.u32 %v1278, %v1294
    %v1297 = vor.u32 %v1295, %v1296
    %v1298 = vsub.s32 4294967266, %v1293
    %v1299 = vadd.s32 %v1298, 127
    %v1300 = vshll.u32 %v1299, 23
    %v1301 = vor.u32 4788187, %v1300
    %v1302 = vand.u32 2147483647, %v1301
    %v1304 = vcvt.s32.f32 %v1297
    %v1305 = vmul.f32 %v1304, %v1302
    %v1306 = vxor.u32 %v1305, 2147483648
    %v1307 = vsel %vm1224, %v1306, %v1305
    %v1308 = vsub.s32 4, %v1284
    %v1309 = vsel %vm1224, %v1308, %v1284
    %v1310 = vsel %vm1223, %v1008, %v1307
    %v1311 = vsel %vm1223, 0, %v1309
    %v1312 = vcosq.f32.pop %v1310
    %v1313 = vsinq.f32.pop %v1310
    %vm1314 = vweird.f32 %v1008
    %v1315 = vadd.s32 %v1311, 3
    %v1316 = vand.u32 %v1315, 3
    %vm1317 = vcmp.lt.s32.totalorder %v1316, 2
    %vm1318 = vcmp.eq.s32.totalorder %v1316, 0
    %v1319 = vxor.u32 %v1313, 2147483648
    %v1320 = vsel %vm1318, %v1312, %v1319
    %vm1321 = vcmp.eq.s32.totalorder %v1316, 2
    %v1322 = vxor.u32 %v1312, 2147483648
    %v1323 = vsel %vm1321, %v1322, %v1313
    %v1324 = vsel %vm1317, %v1320, %v1323
    %v1325 = vsel %vm1314, nan, %v1324
    %v1326 = vand.u32 2147483647, %v1009
    %vm1327 = vcmp.le.f32.partialorder %v1326, 0.7853982
    %vm1328 = vcmp.lt.s32.totalorder %v1009, 0
    %v1329 = vand.u32 %v1009, 2139095040
    %v1330 = vshrl.u32 %v1329, 23
    %v1331 = vsub.s32 %v1330, 127
    %v1332 = vand.u32 2147483647, %v1009
    %v1333 = vand.u32 %v1332, 8388607
    %v1334 = vor.u32 %v1333, 8388608
    %v1335 = vsub.s32 0, %v1334
    %v1336 = vadd.s32 %v1331, 1
    %vm1337 = vcmp.gt.s32.totalorder %v1336, 0
    %v1338 = vsel %vm1337, %v1336, 0
    %v1339 = vshrl.u32 %v1338, 5
    %v1340 = vand.u32 %v1338, 31
    %v1341 = vsub.s32 32, %v1340
    %v1342 = vshrl.u32 683565275, %v1341
    %v1343 = vshll.u32 683565275, %v1340
    %v1344 = vshrl.u32 2475754826, %v1341
    %v1345 = vor.u32 %v1343, %v1344
    %v1346 = vshll.u32 2475754826, %v1340
    %v1347 = vshrl.u32 2131351028, %v1341
    %v1348 = vor.u32 %v1346, %v1347
    %v1349 = vshll.u32 2131351028, %v1340
    %v1350 = vshrl.u32 2102212464, %v1341
    %v1351 = vor.u32 %v1349, %v1350
    %v1352 = vshll.u32 2102212464, %v1340
    %v1353 = vshrl.u32 920167782, %v1341
    %v1354 = vor.u32 %v1352, %v1353
    %v1355 = vshll.u32 920167782, %v1340
    %v1356 = vshrl.u32 1326507024, %v1341
    %v1357 = vor.u32 %v1355, %v1356
    %vm1358 = vcmp.lt.s32.totalorder %v1339, 1
    %vm1359 = vcmp.lt.s32.totalorder %v1339, 2
    %vm1360 = vcmp.lt.s32.totalorder %v1339, 3
    %vm1361 = vcmp.lt.s32.totalorder %v1339, 4
    %v1362 = vsel %vm1358, %v1342, %v1345
    %v1363 = vsel %vm1361, %v1351, 2102212464
    %v1364 = vsel %vm1360, %v1348, %v1363
    %v1365 = vsel %vm1359, %v1362, %v1364
    %v1366 = vsel %vm1358, %v1345, %v1348
    %v1367 = vsel %vm1361, %v1354, 920167782
    %v1368 = vsel %vm1360, %v1351, %v1367
    %v1369 = vsel %vm1359, %v1366, %v1368
    %v1370 = vsel %vm1358, %v1348, %v1351
    %v1371 = vsel %vm1361, %v1357, 1326507024
    %v1372 = vsel %vm1360, %v1354, %v1371
    %v1373 = vsel %vm1359, %v1370, %v1372
    %v1374 = vshll.u32 %v1334, 8
    %v1375 = vmul.u32.u64.compose %v1374, %v1373
    %v1376 = vextract.low.u32 %v1375
    %v1377 = vextract.high.u32 %v1375
    %v1378 = vmul.u32.u64.compose %v1374, %v1369
    %v1379 = vextract.low.u32 %v1378
    %v1380 = vextract.high.u32 %v1378
    %v1381 = vmul.u32 %v1374, %v1365
    %v1382 = vadd.s32 %v1377, %v1379
    %vm1383 = vc.u32 %v1377, %v1379
    %v1384 = vadd.s32 %v1380, 1
    %v1385 = vsel %vm1383, %v1384, %v1380
    %v1386 = vadd.s32 %v1381, %v1385
    %v1387 = vadd.s32 %v1386, 536870912
    %v1388 = vshrl.u32 %v1387, 30
    %v1389 = vshll.u32 %v1388, 30
    %v1390 = vsub.s32 %v1386, %v1389
    %vm1391 = vcmp.lt.s32.totalorder %v1390, 0
    %v1392 = vsub.s32 0, %v1390
    %v1393 = vsel %vm1391, %v1392, %v1390
    %v1394 = vclz %v1393
    %v1395 = vsub.s32 %v1394, 2
    %vm1396 = vcmp.gt.s32.totalorder 0, %v1395
    %v1397 = vsel %vm1396, 0, %v1395
    %v1398 = vsub.s32 32, %v1397
    %v1399 = vshll.u32 %v1390, %v1397
    %v1400 = vshrl.u32 %v1382, %v1398
    %v1401 = vor.u32 %v1399, %v1400
    %v1402 = vsub.s32 4294967266, %v1397
    %v1403 = vadd.s32 %v1402, 127
    %v1404 = vshll.u32 %v1403, 23
    %v1405 = vor.u32 4788187, %v1404
    %v1406 = vand.u32 2147483647, %v1405
    %v1408 = vcvt.s32.f32 %v1401
    %v1409 = vmul.f32 %v1408, %v1406
    %v1410 = vxor.u32 %v1409, 2147483648
    %v1411 = vsel %vm1328, %v1410, %v1409
    %v1412 = vsub.s32 4, %v1388
    %v1413 = vsel %vm1328, %v1412, %v1388
    %v1414 = vsel %vm1327, %v1009, %v1411
    %v1415 = vsel %vm1327, 0, %v1413
    %v1416 = vcosq.f32.pop %v1414
    %v1417 = vsinq.f32.pop %v1414
    %vm1418 = vweird.f32 %v1009
    %v1419 = vadd.s32 %v1415, 3
    %v1420 = vand.u32 %v1419, 3
    %vm1421 = vcmp.lt.s32.totalorder %v1420, 2
    %vm1422 = vcmp.eq.s32.totalorder %v1420, 0
    %v1423 = vxor.u32 %v1417, 2147483648
    %v1424 = vsel %vm1422, %v1416, %v1423
    %vm1425 = vcmp.eq.s32.totalorder %v1420, 2
    %v1426 = vxor.u32 %v1416, 2147483648
    %v1427 = vsel %vm1425, %v1426, %v1417
    %v1428 = vsel %vm1421, %v1424, %v1427
    %v1429 = vsel %vm1418, nan, %v1428
    %v1430 = vand.u32 2147483647, %v1010
    %vm1431 = vcmp.le.f32.partialorder %v1430, 0.7853982
    %vm1432 = vcmp.lt.s32.totalorder %v1010, 0
    %v1433 = vand.u32 %v1010, 2139095040
    %v1434 = vshrl.u32 %v1433, 23
    %v1435 = vsub.s32 %v1434, 127
    %v1436 = vand.u32 2147483647, %v1010
    %v1437 = vand.u32 %v1436, 8388607
    %v1438 = vor.u32 %v1437, 8388608
    %v1439 = vsub.s32 0, %v1438
    %v1440 = vadd.s32 %v1435, 1
    %vm1441 = vcmp.gt.s32.totalorder %v1440, 0
    %v1442 = vsel %vm1441, %v1440, 0
    %v1443 = vshrl.u32 %v1442, 5
    %v1444 = vand.u32 %v1442, 31
    %v1445 = vsub.s32 32, %v1444
    %v1446 = vshrl.u32 683565275, %v1445
    %v1447 = vshll.u32 683565275, %v1444
    %v1448 = vshrl.u32 2475754826, %v1445
    %v1449 = vor.u32 %v1447, %v1448
    %v1450 = vshll.u32 2475754826, %v1444
    %v1451 = vshrl.u32 2131351028, %v1445
    %v1452 = vor.u32 %v1450, %v1451
    %v1453 = vshll.u32 2131351028, %v1444
    %v1454 = vshrl.u32 2102212464, %v1445
    %v1455 = vor.u32 %v1453, %v1454
    %v1456 = vshll.u32 2102212464, %v1444
    %v1457 = vshrl.u32 920167782, %v1445
    %v1458 = vor.u32 %v1456, %v1457
    %v1459 = vshll.u32 920167782, %v1444
    %v1460 = vshrl.u32 1326507024, %v1445
    %v1461 = vor.u32 %v1459, %v1460
    %vm1462 = vcmp.lt.s32.totalorder %v1443, 1
    %vm1463 = vcmp.lt.s32.totalorder %v1443, 2
    %vm1464 = vcmp.lt.s32.totalorder %v1443, 3
    %vm1465 = vcmp.lt.s32.totalorder %v1443, 4
    %v1466 = vsel %vm1462, %v1446, %v1449
    %v1467 = vsel %vm1465, %v1455, 2102212464
    %v1468 = vsel %vm1464, %v1452, %v1467
    %v1469 = vsel %vm1463, %v1466, %v1468
    %v1470 = vsel %vm1462, %v1449, %v1452
    %v1471 = vsel %vm1465, %v1458, 920167782
    %v1472 = vsel %vm1464, %v1455, %v1471
    %v1473 = vsel %vm1463, %v1470, %v1472
    %v1474 = vsel %vm1462, %v1452, %v1455
    %v1475 = vsel %vm1465, %v1461, 1326507024
    %v1476 = vsel %vm1464, %v1458, %v1475
    %v1477 = vsel %vm1463, %v1474, %v1476
    %v1478 = vshll.u32 %v1438, 8
    %v1479 = vmul.u32.u64.compose %v1478, %v1477
    %v1480 = vextract.low.u32 %v1479
    %v1481 = vextract.high.u32 %v1479
    %v1482 = vmul.u32.u64.compose %v1478, %v1473
    %v1483 = vextract.low.u32 %v1482
    %v1484 = vextract.high.u32 %v1482
    %v1485 = vmul.u32 %v1478, %v1469
    %v1486 = vadd.s32 %v1481, %v1483
    %vm1487 = vc.u32 %v1481, %v1483
    %v1488 = vadd.s32 %v1484, 1
    %v1489 = vsel %vm1487, %v1488, %v1484
    %v1490 = vadd.s32 %v1485, %v1489
    %v1491 = vadd.s32 %v1490, 536870912
    %v1492 = vshrl.u32 %v1491, 30
    %v1493 = vshll.u32 %v1492, 30
    %v1494 = vsub.s32 %v1490, %v1493
    %vm1495 = vcmp.lt.s32.totalorder %v1494, 0
    %v1496 = vsub.s32 0, %v1494
    %v1497 = vsel %vm1495, %v1496, %v1494
    %v1498 = vclz %v1497
    %v1499 = vsub.s32 %v1498, 2
    %vm1500 = vcmp.gt.s32.totalorder 0, %v1499
    %v1501 = vsel %vm1500, 0, %v1499
    %v1502 = vsub.s32 32, %v1501
    %v1503 = vshll.u32 %v1494, %v1501
    %v1504 = vshrl.u32 %v1486, %v1502
    %v1505 = vor.u32 %v1503, %v1504
    %v1506 = vsub.s32 4294967266, %v1501
    %v1507 = vadd.s32 %v1506, 127
    %v1508 = vshll.u32 %v1507, 23
    %v1509 = vor.u32 4788187, %v1508
    %v1510 = vand.u32 2147483647, %v1509
    %v1512 = vcvt.s32.f32 %v1505
    %v1513 = vmul.f32 %v1512, %v1510
    %v1514 = vxor.u32 %v1513, 2147483648
    %v1515 = vsel %vm1432, %v1514, %v1513
    %v1516 = vsub.s32 4, %v1492
    %v1517 = vsel %vm1432, %v1516, %v1492
    %v1518 = vsel %vm1431, %v1010, %v1515
    %v1519 = vsel %vm1431, 0, %v1517
    %v1520 = vcosq.f32.pop %v1518
    %v1521 = vsinq.f32.pop %v1518
    %vm1522 = vweird.f32 %v1010
    %v1523 = vadd.s32 %v1519, 3
    %v1524 = vand.u32 %v1523, 3
    %vm1525 = vcmp.lt.s32.totalorder %v1524, 2
    %vm1526 = vcmp.eq.s32.totalorder %v1524, 0
    %v1527 = vxor.u32 %v1521, 2147483648
    %v1528 = vsel %vm1526, %v1520, %v1527
    %vm1529 = vcmp.eq.s32.totalorder %v1524, 2
    %v1530 = vxor.u32 %v1520, 2147483648
    %v1531 = vsel %vm1529, %v1530, %v1521
    %v1532 = vsel %vm1525, %v1528, %v1531
    %v1533 = vsel %vm1522, nan, %v1532
    %v1534 = vand.u32 2147483647, %v1011
    %vm1535 = vcmp.le.f32.partialorder %v1534, 0.7853982
    %vm1536 = vcmp.lt.s32.totalorder %v1011, 0
    %v1537 = vand.u32 %v1011, 2139095040
    %v1538 = vshrl.u32 %v1537, 23
    %v1539 = vsub.s32 %v1538, 127
    %v1540 = vand.u32 2147483647, %v1011
    %v1541 = vand.u32 %v1540, 8388607
    %v1542 = vor.u32 %v1541, 8388608
    %v1543 = vsub.s32 0, %v1542
    %v1544 = vadd.s32 %v1539, 1
    %vm1545 = vcmp.gt.s32.totalorder %v1544, 0
    %v1546 = vsel %vm1545, %v1544, 0
    %v1547 = vshrl.u32 %v1546, 5
    %v1548 = vand.u32 %v1546, 31
    %v1549 = vsub.s32 32, %v1548
    %v1550 = vshrl.u32 683565275, %v1549
    %v1551 = vshll.u32 683565275, %v1548
    %v1552 = vshrl.u32 2475754826, %v1549
    %v1553 = vor.u32 %v1551, %v1552
    %v1554 = vshll.u32 2475754826, %v1548
    %v1555 = vshrl.u32 2131351028, %v1549
    %v1556 = vor.u32 %v1554, %v1555
    %v1557 = vshll.u32 2131351028, %v1548
    %v1558 = vshrl.u32 2102212464, %v1549
    %v1559 = vor.u32 %v1557, %v1558
    %v1560 = vshll.u32 2102212464, %v1548
    %v1561 = vshrl.u32 920167782, %v1549
    %v1562 = vor.u32 %v1560, %v1561
    %v1563 = vshll.u32 920167782, %v1548
    %v1564 = vshrl.u32 1326507024, %v1549
    %v1565 = vor.u32 %v1563, %v1564
    %vm1566 = vcmp.lt.s32.totalorder %v1547, 1
    %vm1567 = vcmp.lt.s32.totalorder %v1547, 2
    %vm1568 = vcmp.lt.s32.totalorder %v1547, 3
    %vm1569 = vcmp.lt.s32.totalorder %v1547, 4
    %v1570 = vsel %vm1566, %v1550, %v1553
    %v1571 = vsel %vm1569, %v1559, 2102212464
    %v1572 = vsel %vm1568, %v1556, %v1571
    %v1573 = vsel %vm1567, %v1570, %v1572
    %v1574 = vsel %vm1566, %v1553, %v1556
    %v1575 = vsel %vm1569, %v1562, 920167782
    %v1576 = vsel %vm1568, %v1559, %v1575
    %v1577 = vsel %vm1567, %v1574, %v1576
    %v1578 = vsel %vm1566, %v1556, %v1559
    %v1579 = vsel %vm1569, %v1565, 1326507024
    %v1580 = vsel %vm1568, %v1562, %v1579
    %v1581 = vsel %vm1567, %v1578, %v1580
    %v1582 = vshll.u32 %v1542, 8
    %v1583 = vmul.u32.u64.compose %v1582, %v1581
    %v1584 = vextract.low.u32 %v1583
    %v1585 = vextract.high.u32 %v1583
    %v1586 = vmul.u32.u64.compose %v1582, %v1577
    %v1587 = vextract.low.u32 %v1586
    %v1588 = vextract.high.u32 %v1586
    %v1589 = vmul.u32 %v1582, %v1573
    %v1590 = vadd.s32 %v1585, %v1587
    %vm1591 = vc.u32 %v1585, %v1587
    %v1592 = vadd.s32 %v1588, 1
    %v1593 = vsel %vm1591, %v1592, %v1588
    %v1594 = vadd.s32 %v1589, %v1593
    %v1595 = vadd.s32 %v1594, 536870912
    %v1596 = vshrl.u32 %v1595, 30
    %v1597 = vshll.u32 %v1596, 30
    %v1598 = vsub.s32 %v1594, %v1597
    %vm1599 = vcmp.lt.s32.totalorder %v1598, 0
    %v1600 = vsub.s32 0, %v1598
    %v1601 = vsel %vm1599, %v1600, %v1598
    %v1602 = vclz %v1601
    %v1603 = vsub.s32 %v1602, 2
    %vm1604 = vcmp.gt.s32.totalorder 0, %v1603
    %v1605 = vsel %vm1604, 0, %v1603
    %v1606 = vsub.s32 32, %v1605
    %v1607 = vshll.u32 %v1598, %v1605
    %v1608 = vshrl.u32 %v1590, %v1606
    %v1609 = vor.u32 %v1607, %v1608
    %v1610 = vsub.s32 4294967266, %v1605
    %v1611 = vadd.s32 %v1610, 127
    %v1612 = vshll.u32 %v1611, 23
    %v1613 = vor.u32 4788187, %v1612
    %v1614 = vand.u32 2147483647, %v1613
    %v1616 = vcvt.s32.f32 %v1609
    %v1617 = vmul.f32 %v1616, %v1614
    %v1618 = vxor.u32 %v1617, 2147483648
    %v1619 = vsel %vm1536, %v1618, %v1617
    %v1620 = vsub.s32 4, %v1596
    %v1621 = vsel %vm1536, %v1620, %v1596
    %v1622 = vsel %vm1535, %v1011, %v1619
    %v1623 = vsel %vm1535, 0, %v1621
    %v1624 = vcosq.f32.pop %v1622
    %v1625 = vsinq.f32.pop %v1622
    %vm1626 = vweird.f32 %v1011
    %v1627 = vadd.s32 %v1623, 3
    %v1628 = vand.u32 %v1627, 3
    %vm1629 = vcmp.lt.s32.totalorder %v1628, 2
    %vm1630 = vcmp.eq.s32.totalorder %v1628, 0
    %v1631 = vxor.u32 %v1625, 2147483648
    %v1632 = vsel %vm1630, %v1624, %v1631
    %vm1633 = vcmp.eq.s32.totalorder %v1628, 2
    %v1634 = vxor.u32 %v1624, 2147483648
    %v1635 = vsel %vm1633, %v1634, %v1625
    %v1636 = vsel %vm1629, %v1632, %v1635
    %v1637 = vsel %vm1626, nan, %v1636
    %v1638 = vand.u32 2147483647, %v1012
    %vm1639 = vcmp.le.f32.partialorder %v1638, 0.7853982
    %vm1640 = vcmp.lt.s32.totalorder %v1012, 0
    %v1641 = vand.u32 %v1012, 2139095040
    %v1642 = vshrl.u32 %v1641, 23
    %v1643 = vsub.s32 %v1642, 127
    %v1644 = vand.u32 2147483647, %v1012
    %v1645 = vand.u32 %v1644, 8388607
    %v1646 = vor.u32 %v1645, 8388608
    %v1647 = vsub.s32 0, %v1646
    %v1648 = vadd.s32 %v1643, 1
    %vm1649 = vcmp.gt.s32.totalorder %v1648, 0
    %v1650 = vsel %vm1649, %v1648, 0
    %v1651 = vshrl.u32 %v1650, 5
    %v1652 = vand.u32 %v1650, 31
    %v1653 = vsub.s32 32, %v1652
    %v1654 = vshrl.u32 683565275, %v1653
    %v1655 = vshll.u32 683565275, %v1652
    %v1656 = vshrl.u32 2475754826, %v1653
    %v1657 = vor.u32 %v1655, %v1656
    %v1658 = vshll.u32 2475754826, %v1652
    %v1659 = vshrl.u32 2131351028, %v1653
    %v1660 = vor.u32 %v1658, %v1659
    %v1661 = vshll.u32 2131351028, %v1652
    %v1662 = vshrl.u32 2102212464, %v1653
    %v1663 = vor.u32 %v1661, %v1662
    %v1664 = vshll.u32 2102212464, %v1652
    %v1665 = vshrl.u32 920167782, %v1653
    %v1666 = vor.u32 %v1664, %v1665
    %v1667 = vshll.u32 920167782, %v1652
    %v1668 = vshrl.u32 1326507024, %v1653
    %v1669 = vor.u32 %v1667, %v1668
    %vm1670 = vcmp.lt.s32.totalorder %v1651, 1
    %vm1671 = vcmp.lt.s32.totalorder %v1651, 2
    %vm1672 = vcmp.lt.s32.totalorder %v1651, 3
    %vm1673 = vcmp.lt.s32.totalorder %v1651, 4
    %v1674 = vsel %vm1670, %v1654, %v1657
    %v1675 = vsel %vm1673, %v1663, 2102212464
    %v1676 = vsel %vm1672, %v1660, %v1675
    %v1677 = vsel %vm1671, %v1674, %v1676
    %v1678 = vsel %vm1670, %v1657, %v1660
    %v1679 = vsel %vm1673, %v1666, 920167782
    %v1680 = vsel %vm1672, %v1663, %v1679
    %v1681 = vsel %vm1671, %v1678, %v1680
    %v1682 = vsel %vm1670, %v1660, %v1663
    %v1683 = vsel %vm1673, %v1669, 1326507024
    %v1684 = vsel %vm1672, %v1666, %v1683
    %v1685 = vsel %vm1671, %v1682, %v1684
    %v1686 = vshll.u32 %v1646, 8
    %v1687 = vmul.u32.u64.compose %v1686, %v1685
    %v1688 = vextract.low.u32 %v1687
    %v1689 = vextract.high.u32 %v1687
    %v1690 = vmul.u32.u64.compose %v1686, %v1681
    %v1691 = vextract.low.u32 %v1690
    %v1692 = vextract.high.u32 %v1690
    %v1693 = vmul.u32 %v1686, %v1677
    %v1694 = vadd.s32 %v1689, %v1691
    %vm1695 = vc.u32 %v1689, %v1691
    %v1696 = vadd.s32 %v1692, 1
    %v1697 = vsel %vm1695, %v1696, %v1692
    %v1698 = vadd.s32 %v1693, %v1697
    %v1699 = vadd.s32 %v1698, 536870912
    %v1700 = vshrl.u32 %v1699, 30
    %v1701 = vshll.u32 %v1700, 30
    %v1702 = vsub.s32 %v1698, %v1701
    %vm1703 = vcmp.lt.s32.totalorder %v1702, 0
    %v1704 = vsub.s32 0, %v1702
    %v1705 = vsel %vm1703, %v1704, %v1702
    %v1706 = vclz %v1705
    %v1707 = vsub.s32 %v1706, 2
    %vm1708 = vcmp.gt.s32.totalorder 0, %v1707
    %v1709 = vsel %vm1708, 0, %v1707
    %v1710 = vsub.s32 32, %v1709
    %v1711 = vshll.u32 %v1702, %v1709
    %v1712 = vshrl.u32 %v1694, %v1710
    %v1713 = vor.u32 %v1711, %v1712
    %v1714 = vsub.s32 4294967266, %v1709
    %v1715 = vadd.s32 %v1714, 127
    %v1716 = vshll.u32 %v1715, 23
    %v1717 = vor.u32 4788187, %v1716
    %v1718 = vand.u32 2147483647, %v1717
    %v1720 = vcvt.s32.f32 %v1713
    %v1721 = vmul.f32 %v1720, %v1718
    %v1722 = vxor.u32 %v1721, 2147483648
    %v1723 = vsel %vm1640, %v1722, %v1721
    %v1724 = vsub.s32 4, %v1700
    %v1725 = vsel %vm1640, %v1724, %v1700
    %v1726 = vsel %vm1639, %v1012, %v1723
    %v1727 = vsel %vm1639, 0, %v1725
    %v1728 = vcosq.f32.pop %v1726
    %v1729 = vsinq.f32.pop %v1726
    %vm1730 = vweird.f32 %v1012
    %v1731 = vadd.s32 %v1727, 3
    %v1732 = vand.u32 %v1731, 3
    %vm1733 = vcmp.lt.s32.totalorder %v1732, 2
    %vm1734 = vcmp.eq.s32.totalorder %v1732, 0
    %v1735 = vxor.u32 %v1729, 2147483648
    %v1736 = vsel %vm1734, %v1728, %v1735
    %vm1737 = vcmp.eq.s32.totalorder %v1732, 2
    %v1738 = vxor.u32 %v1728, 2147483648
    %v1739 = vsel %vm1737, %v1738, %v1729
    %v1740 = vsel %vm1733, %v1736, %v1739
    %v1741 = vsel %vm1730, nan, %v1740
    %v1742 = vand.u32 2147483647, %v1013
    %vm1743 = vcmp.le.f32.partialorder %v1742, 0.7853982
    %vm1744 = vcmp.lt.s32.totalorder %v1013, 0
    %v1745 = vand.u32 %v1013, 2139095040
    %v1746 = vshrl.u32 %v1745, 23
    %v1747 = vsub.s32 %v1746, 127
    %v1748 = vand.u32 2147483647, %v1013
    %v1749 = vand.u32 %v1748, 8388607
    %v1750 = vor.u32 %v1749, 8388608
    %v1751 = vsub.s32 0, %v1750
    %v1752 = vadd.s32 %v1747, 1
    %vm1753 = vcmp.gt.s32.totalorder %v1752, 0
    %v1754 = vsel %vm1753, %v1752, 0
    %v1755 = vshrl.u32 %v1754, 5
    %v1756 = vand.u32 %v1754, 31
    %v1757 = vsub.s32 32, %v1756
    %v1758 = vshrl.u32 683565275, %v1757
    %v1759 = vshll.u32 683565275, %v1756
    %v1760 = vshrl.u32 2475754826, %v1757
    %v1761 = vor.u32 %v1759, %v1760
    %v1762 = vshll.u32 2475754826, %v1756
    %v1763 = vshrl.u32 2131351028, %v1757
    %v1764 = vor.u32 %v1762, %v1763
    %v1765 = vshll.u32 2131351028, %v1756
    %v1766 = vshrl.u32 2102212464, %v1757
    %v1767 = vor.u32 %v1765, %v1766
    %v1768 = vshll.u32 2102212464, %v1756
    %v1769 = vshrl.u32 920167782, %v1757
    %v1770 = vor.u32 %v1768, %v1769
    %v1771 = vshll.u32 920167782, %v1756
    %v1772 = vshrl.u32 1326507024, %v1757
    %v1773 = vor.u32 %v1771, %v1772
    %vm1774 = vcmp.lt.s32.totalorder %v1755, 1
    %vm1775 = vcmp.lt.s32.totalorder %v1755, 2
    %vm1776 = vcmp.lt.s32.totalorder %v1755, 3
    %vm1777 = vcmp.lt.s32.totalorder %v1755, 4
    %v1778 = vsel %vm1774, %v1758, %v1761
    %v1779 = vsel %vm1777, %v1767, 2102212464
    %v1780 = vsel %vm1776, %v1764, %v1779
    %v1781 = vsel %vm1775, %v1778, %v1780
    %v1782 = vsel %vm1774, %v1761, %v1764
    %v1783 = vsel %vm1777, %v1770, 920167782
    %v1784 = vsel %vm1776, %v1767, %v1783
    %v1785 = vsel %vm1775, %v1782, %v1784
    %v1786 = vsel %vm1774, %v1764, %v1767
    %v1787 = vsel %vm1777, %v1773, 1326507024
    %v1788 = vsel %vm1776, %v1770, %v1787
    %v1789 = vsel %vm1775, %v1786, %v1788
    %v1790 = vshll.u32 %v1750, 8
    %v1791 = vmul.u32.u64.compose %v1790, %v1789
    %v1792 = vextract.low.u32 %v1791
    %v1793 = vextract.high.u32 %v1791
    %v1794 = vmul.u32.u64.compose %v1790, %v1785
    %v1795 = vextract.low.u32 %v1794
    %v1796 = vextract.high.u32 %v1794
    %v1797 = vmul.u32 %v1790, %v1781
    %v1798 = vadd.s32 %v1793, %v1795
    %vm1799 = vc.u32 %v1793, %v1795
    %v1800 = vadd.s32 %v1796, 1
    %v1801 = vsel %vm1799, %v1800, %v1796
    %v1802 = vadd.s32 %v1797, %v1801
    %v1803 = vadd.s32 %v1802, 536870912
    %v1804 = vshrl.u32 %v1803, 30
    %v1805 = vshll.u32 %v1804, 30
    %v1806 = vsub.s32 %v1802, %v1805
    %vm1807 = vcmp.lt.s32.totalorder %v1806, 0
    %v1808 = vsub.s32 0, %v1806
    %v1809 = vsel %vm1807, %v1808, %v1806
    %v1810 = vclz %v1809
    %v1811 = vsub.s32 %v1810, 2
    %vm1812 = vcmp.gt.s32.totalorder 0, %v1811
    %v1813 = vsel %vm1812, 0, %v1811
    %v1814 = vsub.s32 32, %v1813
    %v1815 = vshll.u32 %v1806, %v1813
    %v1816 = vshrl.u32 %v1798, %v1814
    %v1817 = vor.u32 %v1815, %v1816
    %v1818 = vsub.s32 4294967266, %v1813
    %v1819 = vadd.s32 %v1818, 127
    %v1820 = vshll.u32 %v1819, 23
    %v1821 = vor.u32 4788187, %v1820
    %v1822 = vand.u32 2147483647, %v1821
    %v1824 = vcvt.s32.f32 %v1817
    %v1825 = vmul.f32 %v1824, %v1822
    %v1826 = vxor.u32 %v1825, 2147483648
    %v1827 = vsel %vm1744, %v1826, %v1825
    %v1828 = vsub.s32 4, %v1804
    %v1829 = vsel %vm1744, %v1828, %v1804
    %v1830 = vsel %vm1743, %v1013, %v1827
    %v1831 = vsel %vm1743, 0, %v1829
    %v1832 = vcosq.f32.pop %v1830
    %v1833 = vsinq.f32.pop %v1830
    %vm1834 = vweird.f32 %v1013
    %v1835 = vadd.s32 %v1831, 3
    %v1836 = vand.u32 %v1835, 3
    %vm1837 = vcmp.lt.s32.totalorder %v1836, 2
    %vm1838 = vcmp.eq.s32.totalorder %v1836, 0
    %v1839 = vxor.u32 %v1833, 2147483648
    %v1840 = vsel %vm1838, %v1832, %v1839
    %vm1841 = vcmp.eq.s32.totalorder %v1836, 2
    %v1842 = vxor.u32 %v1832, 2147483648
    %v1843 = vsel %vm1841, %v1842, %v1833
    %v1844 = vsel %vm1837, %v1840, %v1843
    %v1845 = vsel %vm1834, nan, %v1844
    %1846 = vst [vmem:[#allocation2 + $0x40] sm:$0xff] %v1117
    %1847 = vst [vmem:[#allocation2 + $0x48] sm:$0xff] %v1221
    %1848 = vst [vmem:[#allocation2 + $0x50] sm:$0xff] %v1325
    %1849 = vst [vmem:[#allocation2 + $0x58] sm:$0xff] %v1429
    %1850 = vst [vmem:[#allocation2 + $0x60] sm:$0xff] %v1533
    %1851 = vst [vmem:[#allocation2 + $0x68] sm:$0xff] %v1637
    %1852 = vst [vmem:[#allocation2 + $0x70] sm:$0xff] %v1741
    %1853 = vst [vmem:[#allocation2 + $0x78] sm:$0xff] %v1845
    // Predicated region
    $region10: #{tpu_custom_call.1} parent=1 // pred_check
      _
    $region11: #{tpu_custom_call.1} parent=1 // pred_check_branch
      %1855 = sbr.rel (0) target = $region13
    $region12: #{tpu_custom_call.1} parent=1 // pred_region
      %s1857 = ssub.s32 2048, 2048
      %1858 = vsyncadd [#allocation3], %s1857
      %s1859 = sshll.u32 [#allocation2], 4
      %s1860 = int_to_ptr.vmem [resolvable:$true] %s1859
      %1865 = dma.vmem_to_hbm [thread:$0]  %s1860, 2048, %s2, [#allocation3], 256, 256, 16
    $region13: #{tpu_custom_call.1} parent=1 // pred_fallthru
      _
    // Predicated region
    $region14: #{tpu_custom_call.1} parent=1 // pred_check
      _
    $region15: #{tpu_custom_call.1} parent=1 // pred_check_branch
      %1867 = sbr.rel (0) target = $region17
    $region16: #{tpu_custom_call.1} parent=1 // pred_region
      %1868 = dma.done [#allocation3], 2048
    $region17: #{tpu_custom_call.1} parent=1 // pred_fallthru
      _
    %1869 = vsyncpa [#allocation3], 1

</llo_original>
